<compile_context>
chip_gen: v5e
topology: v5e:2x2
jax: 0.10.0
libtpu: 0.0.40
codegen_flags: <defaults>
</compile_context>

<pallas_src>
import math
import jax
import jax.numpy as jnp
from jax import lax
from jax.experimental import pallas as pl
from jax.experimental.pallas import tpu as pltpu

EPS_BN = 1e-5
P0 = 32            # 2**(number of stride-2 conv layers): phases packed per row
K = 4              # Conv1d kernel size


# ------------------------------ Pallas kernel --------------------------------

def _timeconv_kernel(x_ref, w1_ref, w2_ref, w3_ref, w4_ref, w5_ref,
                     shift_ref, hscale_ref, hshift_ref, linw_ref, linb_ref,
                     o_ref):
    """Whole TimeConv forward for one sample (one grid step)."""
    j = x_ref.shape[1]                      # rows per phase-packed slab (L // 32)

    # Constant 0/1 row-shift matrices, built once from iota (applied on the MXU).
    rows = lax.broadcasted_iota(jnp.int32, (j, j), 0)
    cols = lax.broadcasted_iota(jnp.int32, (j, j), 1)
    s_down = (rows == cols + 1).astype(jnp.float32)   # (s_down @ v)[r] = v[r-1], row 0    -> 0
    s_up = (rows + 1 == cols).astype(jnp.float32)     # (s_up   @ v)[r] = v[r+1], last row -> 0

    def conv_bn_relu(a, w_ref, layer):
        # a: (j, P*Cin) phase-packed activation.
        # w_ref: (3*P*Cin, (P//2)*Cout) packed weight (BN scale folded in):
        #   rows [0   : PC )  main block  (taps that stay inside row r)
        #   rows [PC  : 2PC)  down halo   (tap x[P*r - 1] taken from row r-1)
        #   rows [2PC : 3PC)  up   halo   (tap x[P*r + P] taken from row r+1)
        pc = a.shape[1]
        shift = shift_ref[layer:layer + 1, :]                        # (1, 128) BN shift
        a_dn = jnp.dot(s_down, a, preferred_element_type=jnp.float32)
        a_up = jnp.dot(s_up, a, preferred_element_type=jnp.float32)
        acc = jnp.dot(a, w_ref[0:pc, :], preferred_element_type=jnp.float32)
        acc += jnp.dot(a_dn, w_ref[pc:2 * pc, :], preferred_element_type=jnp.float32)
        acc += jnp.dot(a_up, w_ref[2 * pc:3 * pc, :], preferred_element_type=jnp.float32)
        return jnp.maximum(acc + shift, 0.0)                         # BN shift + ReLU

    a = x_ref[0]                            # (j, 32)  == packed (L, 1) input
    a = conv_bn_relu(a, w1_ref, 0)          # (j, 128) == 16 phases x   8 ch
    a = conv_bn_relu(a, w2_ref, 1)          # (j, 128) ==  8 phases x  16 ch
    a = conv_bn_relu(a, w3_ref, 2)          # (j, 128) ==  4 phases x  32 ch
    a = conv_bn_relu(a, w4_ref, 3)          # (j, 128) ==  2 phases x  64 ch
    a = conv_bn_relu(a, w5_ref, 4)          # (j, 128) ==  1 phase  x 128 ch  (time-major)

    pooled = jnp.mean(a, axis=0, keepdims=True)                  # AdaptiveAvgPool1d(1)+Flatten
    ssq = jnp.sum(pooled * pooled, axis=1, keepdims=True)
    pooled = pooled * lax.rsqrt(jnp.maximum(ssq, 1e-24))         # F.normalize(dim=1), eps=1e-12
    z = pooled * hscale_ref[...] + hshift_ref[...]               # BatchNorm1d (eval)
    z = jnp.where(z >= 0.0, z, 0.01 * z)                         # LeakyReLU(0.01)
    logits = jnp.dot(z, linw_ref[...],
                     preferred_element_type=jnp.float32) + linb_ref[...]
    m = jnp.max(logits, axis=1, keepdims=True)                   # Softmax(dim=1)
    e = jnp.exp(logits - m)
    o_ref[0] = e / jnp.sum(e, axis=1, keepdims=True)


# --------------------------- weight packing (host) ----------------------------

def _pack_conv_weight(w, bn_scale, P):
    """Pack a Conv1d(k=4, s=2, p=1) weight (with BN scale folded) for the
    phase-packed layout.  Returns (3*P*Cin, (P//2)*Cout) = [main ; down ; up]:
      main[p*Cin+ci, pp*Cout+co] = w[co,ci,kk]*scale[co]  where kk = p - 2*pp + 1
      down: only rows p = P-1 feed output phase 0      via tap kk = 0
      up:   only rows p = 0   feed output phase P/2-1  via tap kk = 3
    """
    Cout, Cin, k = w.shape
    assert k == K
    Pout = P // 2
    wt = jnp.transpose(jnp.asarray(w, jnp.float32) * bn_scale[:, None, None],
                       (2, 1, 0))                       # (K, Cin, Cout)
    pc = P * Cin
    main = jnp.zeros((pc, Pout * Cout), jnp.float32)
    for pp in range(Pout):
        for kk in range(K):
            p = 2 * pp - 1 + kk
            if 0 <= p < P:
                main = main.at[p * Cin:(p + 1) * Cin,
                               pp * Cout:(pp + 1) * Cout].set(wt[kk])
    down = jnp.zeros((pc, Pout * Cout), jnp.float32)
    down = down.at[(P - 1) * Cin:P * Cin, 0:Cout].set(wt[0])
    up = jnp.zeros((pc, Pout * Cout), jnp.float32)
    up = up.at[0:Cin, (Pout - 1) * Cout:Pout * Cout].set(wt[3])
    return jnp.concatenate([main, down, up], axis=0)


# --------------------------------- wrapper ------------------------------------

def time_conv_forward(x, params):
    B = x.shape[0]
    xf = x.reshape(B, -1).astype(jnp.float32)           # torch: x.view(B, 1, -1)
    L = xf.shape[1]
    assert L % P0 == 0, "sequence length must be divisible by 2**5"
    J = L // P0
    x_packed = xf.reshape(B, J, P0)                     # A[b, j, p] = x[b, 32*j + p]

    packed_ws, shift_rows = [], []
    P = P0
    for w, bn in params["convs"]:
        scale = bn["gamma"] / jnp.sqrt(bn["var"] + EPS_BN)
        shift = bn["beta"] - bn["mean"] * scale
        packed_ws.append(_pack_conv_weight(w, scale, P))
        shift_rows.append(jnp.tile(shift, P // 2))      # ((P//2)*Cout,) == (128,)
        P //= 2
    shifts = jnp.stack(shift_rows, axis=0)              # (5, 128)

    hb = params["head_bn"]
    hscale = hb["gamma"] / jnp.sqrt(hb["var"] + EPS_BN)
    hshift = hb["beta"] - hb["mean"] * hscale
    feat = hscale.shape[0]
    hscale = hscale.reshape(1, feat)
    hshift = hshift.reshape(1, feat)
    lin_w = jnp.asarray(params["lin_w"], jnp.float32).T          # (feat, nb_class)
    lin_b = jnp.asarray(params["lin_b"], jnp.float32).reshape(1, -1)
    nb_class = lin_w.shape[1]

    def full(a):
        nd = a.ndim
        return pl.BlockSpec(a.shape, lambda b, _nd=nd: (0,) * _nd)

    out = pl.pallas_call(
        _timeconv_kernel,
        out_shape=jax.ShapeDtypeStruct((B, 1, nb_class), jnp.float32),
        grid_spec=pltpu.PrefetchScalarGridSpec(
            num_scalar_prefetch=0,
            grid=(B,),
            in_specs=[pl.BlockSpec((1, J, P0), lambda b: (b, 0, 0))]
                     + [full(wp) for wp in packed_ws]
                     + [full(shifts), full(hscale), full(hshift),
                        full(lin_w), full(lin_b)],
            out_specs=pl.BlockSpec((1, 1, nb_class), lambda b: (b, 0, 0)),
        ),
        compiler_params=pltpu.CompilerParams(
            dimension_semantics=("parallel",)),
    )(x_packed, *packed_ws, shifts, hscale, hshift, lin_w, lin_b)
    return out.reshape(B, nb_class)


# ----------------------------- parameter setup --------------------------------

def make_params(key, feature_size=64, nb_class=3, randomize=False):
    """Parameters matching TimeConv.__init__.  randomize=True perturbs the BN
    buffers and the Linear layer so the numerical check is non-degenerate."""
    chans = [(1, 8), (8, 16), (16, 32), (32, 64), (64, 128)]
    convs = []
    for cin, cout in chans:
        key, kw = jax.random.split(key)
        fan_in, fan_out = cin * K, cout * K              # xavier_normal_ for Conv1d
        std = math.sqrt(2.0 / (fan_in + fan_out))
        w = std * jax.random.normal(kw, (cout, cin, K), jnp.float32)
        if randomize:
            key, k1, k2, k3, k4 = jax.random.split(key, 5)
            bn = dict(gamma=jax.random.uniform(k1, (cout,), jnp.float32, 0.5, 1.5),
                      beta=0.1 * jax.random.normal(k2, (cout,), jnp.float32),
                      mean=0.1 * jax.random.normal(k3, (cout,), jnp.float32),
                      var=jax.random.uniform(k4, (cout,), jnp.float32, 0.5, 1.5))
        else:
            bn = dict(gamma=jnp.ones((cout,), jnp.float32),
                      beta=jnp.zeros((cout,), jnp.float32),
                      mean=jnp.zeros((cout,), jnp.float32),
                      var=jnp.ones((cout,), jnp.float32))
        convs.append((w, bn))
    feat = feature_size * 2
    if randomize:
        key, k1, k2, k3, k4, k5, k6 = jax.random.split(key, 7)
        head_bn = dict(gamma=jax.random.uniform(k1, (feat,), jnp.float32, 0.5, 1.5),
                       beta=0.1 * jax.random.normal(k2, (feat,), jnp.float32),
                       mean=0.1 * jax.random.normal(k3, (feat,), jnp.float32),
                       var=jax.random.uniform(k4, (feat,), jnp.float32, 0.5, 1.5))
        lin_w = 0.5 * jax.random.normal(k5, (nb_class, feat), jnp.float32)
        lin_b = 0.1 * jax.random.normal(k6, (nb_class,), jnp.float32)
    else:
        head_bn = dict(gamma=jnp.ones((feat,), jnp.float32),
                       beta=jnp.zeros((feat,), jnp.float32),
                       mean=jnp.zeros((feat,), jnp.float32),
                       var=jnp.ones((feat,), jnp.float32))
        lin_w = jnp.ones((nb_class, feat), jnp.float32)   # nn.init.constant_(weight, 1)
        lin_b = jnp.zeros((nb_class,), jnp.float32)       # nn.init.constant_(bias, 0)
    return dict(convs=convs, head_bn=head_bn, lin_w=lin_w, lin_b=lin_b)


# ----------------------------- pure-JAX reference -----------------------------

def ref_forward(x, params):
    B = x.shape[0]
    h = x.reshape(B, 1, -1).astype(jnp.float32)           # NCL
    for w, bn in params["convs"]:
        h = lax.conv_general_dilated(h, w, (2,), [(1, 1)],
                                     dimension_numbers=("NCH", "OIH", "NCH"),
                                     precision=lax.Precision.HIGHEST)
        inv = bn["gamma"] / jnp.sqrt(bn["var"] + EPS_BN)
        h = h * inv[None, :, None] + (bn["beta"] - bn["mean"] * inv)[None, :, None]
        h = jnp.maximum(h, 0.0)
    h = jnp.mean(h, axis=2)
    h = h / jnp.maximum(jnp.linalg.norm(h, axis=1, keepdims=True), 1e-12)
    bn = params["head_bn"]
    inv = bn["gamma"] / jnp.sqrt(bn["var"] + EPS_BN)
    h = h * inv[None, :] + (bn["beta"] - bn["mean"] * inv)[None, :]
    h = jnp.where(h >= 0, h, 0.01 * h)
    logits = jnp.dot(h, params["lin_w"].T,
                     precision=lax.Precision.HIGHEST) + params["lin_b"][None, :]
    logits = logits - jnp.max(logits, axis=1, keepdims=True)
    e = jnp.exp(logits)
    return e / jnp.sum(e, axis=1, keepdims=True)


# ----------------------------------- main --------------------------------------

if __name__ == "__main__":
    key = jax.random.PRNGKey(0)
    k_params, k_rand, k_x = jax.random.split(key, 3)

    # x.view(B, 1, -1) -> L = 4*16*16 = 1024 (divisible by 2^5)
    x = jax.random.normal(k_x, (2, 4, 16, 16), jnp.float32)

    fwd = jax.jit(time_conv_forward)
    ref = jax.jit(ref_forward)

    # 1) faithful TimeConv.__init__ parameters (eval-mode BN, constant Linear).
    params = make_params(k_params, feature_size=64, nb_class=3)
    out = jax.block_until_ready(fwd(x, params))
    gold = jax.block_until_ready(ref(x, params))
    assert out.shape == (2, 3), out.shape
    assert jnp.allclose(jnp.sum(out, axis=1), 1.0, atol=1e-5)
    assert jnp.allclose(out, gold, atol=1e-4, rtol=1e-4), (out, gold)

    # 2) randomized BN buffers / Linear weights: non-degenerate softmax output,
    #    exercises the BN folding and every conv tap of the packed weights.
    params_r = make_params(k_rand, feature_size=64, nb_class=3, randomize=True)
    out_r = jax.block_until_ready(fwd(x, params_r))
    gold_r = jax.block_until_ready(ref(x, params_r))
    assert jnp.allclose(jnp.sum(out_r, axis=1), 1.0, atol=1e-5)
    assert jnp.allclose(out_r, gold_r, atol=1e-4, rtol=1e-4), (out_r, gold_r)

    print("KERNEL_OK")
</pallas_src>

<mosaic_0001>
module attributes {stable_mosaic.version = 11 : i64} {
  func.func @_timeconv_kernel(%arg0: i32, %arg1: memref<1x32x32xf32, #tpu.memory_space<vmem>>, %arg2: memref<96x128xf32, #tpu.memory_space<vmem>>, %arg3: memref<384x128xf32, #tpu.memory_space<vmem>>, %arg4: memref<384x128xf32, #tpu.memory_space<vmem>>, %arg5: memref<384x128xf32, #tpu.memory_space<vmem>>, %arg6: memref<384x128xf32, #tpu.memory_space<vmem>>, %arg7: memref<5x128xf32, #tpu.memory_space<vmem>>, %arg8: memref<1x128xf32, #tpu.memory_space<vmem>>, %arg9: memref<1x128xf32, #tpu.memory_space<vmem>>, %arg10: memref<128x3xf32, #tpu.memory_space<vmem>>, %arg11: memref<1x3xf32, #tpu.memory_space<vmem>>, %arg12: memref<1x1x3xf32, #tpu.memory_space<vmem>>) attributes {dimension_semantics = [#tpu.dimension_semantics<parallel>], iteration_bounds = array<i64: 2>, scalar_prefetch = 0 : i64, scratch_operands = 0 : i64, tpu.core_type = #tpu.core_type<tc>, window_params = [{transform_indices = @transform_0, window_bounds = array<i64: 1, 32, 32>}, {pipeline_mode = #tpu.pipeline_mode<synchronous>, transform_indices = @transform_1, window_bounds = array<i64: 96, 128>}, {pipeline_mode = #tpu.pipeline_mode<synchronous>, transform_indices = @transform_2, window_bounds = array<i64: 384, 128>}, {pipeline_mode = #tpu.pipeline_mode<synchronous>, transform_indices = @transform_3, window_bounds = array<i64: 384, 128>}, {pipeline_mode = #tpu.pipeline_mode<synchronous>, transform_indices = @transform_4, window_bounds = array<i64: 384, 128>}, {pipeline_mode = #tpu.pipeline_mode<synchronous>, transform_indices = @transform_5, window_bounds = array<i64: 384, 128>}, {pipeline_mode = #tpu.pipeline_mode<synchronous>, transform_indices = @transform_6, window_bounds = array<i64: 5, 128>}, {pipeline_mode = #tpu.pipeline_mode<synchronous>, transform_indices = @transform_7, window_bounds = array<i64: 1, 128>}, {pipeline_mode = #tpu.pipeline_mode<synchronous>, transform_indices = @transform_8, window_bounds = array<i64: 1, 128>}, {pipeline_mode = #tpu.pipeline_mode<synchronous>, transform_indices = @transform_9, window_bounds = array<i64: 128, 3>}, {pipeline_mode = #tpu.pipeline_mode<synchronous>, transform_indices = @transform_10, window_bounds = array<i64: 1, 3>}, {transform_indices = @transform_11, window_bounds = array<i64: 1, 1, 3>}]} {
    %0 = tpu.iota {dimensions = array<i32: 0>} : vector<32x32xi32>
    %1 = tpu.iota {dimensions = array<i32: 1>} : vector<32x32xi32>
    %c1_i32 = arith.constant 1 : i32
    %2 = vector.broadcast %c1_i32 : i32 to vector<32x32xi32>
    %3 = arith.addi %1, %2 : vector<32x32xi32>
    %4 = arith.cmpi eq, %0, %3 : vector<32x32xi32>
    %5 = arith.extui %4 : vector<32x32xi1> to vector<32x32xi32>
    %6 = arith.sitofp %5 : vector<32x32xi32> to vector<32x32xf32>
    %c1_i32_0 = arith.constant 1 : i32
    %7 = vector.broadcast %c1_i32_0 : i32 to vector<32x32xi32>
    %8 = arith.addi %0, %7 : vector<32x32xi32>
    %9 = arith.cmpi eq, %8, %1 : vector<32x32xi32>
    %10 = arith.extui %9 : vector<32x32xi1> to vector<32x32xi32>
    %11 = arith.sitofp %10 : vector<32x32xi32> to vector<32x32xf32>
    %c0 = arith.constant 0 : index
    %c0_1 = arith.constant 0 : index
    %c0_2 = arith.constant 0 : index
    %12 = vector.load %arg1[%c0, %c0_1, %c0_2] : memref<1x32x32xf32, #tpu.memory_space<vmem>>, vector<1x32x32xf32>
    %13 = vector.shape_cast %12 : vector<1x32x32xf32> to vector<32x32xf32>
    %c0_3 = arith.constant 0 : index
    %c0_4 = arith.constant 0 : index
    %14 = vector.load %arg7[%c0_3, %c0_4] : memref<5x128xf32, #tpu.memory_space<vmem>>, vector<1x128xf32>
    %cst = arith.constant dense<0.000000e+00> : vector<32x32xf32>
    %15 = tpu.matmul %6, %13, %cst {dimension_numbers = #tpu.dot_dimension_numbers<[1], [0], [0], [1], [0, 0, 1, 1], [], []>} : vector<32x32xf32>, vector<32x32xf32>, vector<32x32xf32> -> vector<32x32xf32>
    %cst_5 = arith.constant dense<0.000000e+00> : vector<32x32xf32>
    %16 = tpu.matmul %11, %13, %cst_5 {dimension_numbers = #tpu.dot_dimension_numbers<[1], [0], [0], [1], [0, 0, 1, 1], [], []>} : vector<32x32xf32>, vector<32x32xf32>, vector<32x32xf32> -> vector<32x32xf32>
    %c0_6 = arith.constant 0 : index
    %c0_7 = arith.constant 0 : index
    %17 = vector.load %arg2[%c0_6, %c0_7] : memref<96x128xf32, #tpu.memory_space<vmem>>, vector<32x128xf32>
    %cst_8 = arith.constant dense<0.000000e+00> : vector<32x128xf32>
    %18 = tpu.matmul %13, %17, %cst_8 {dimension_numbers = #tpu.dot_dimension_numbers<[1], [0], [0], [1], [0, 0, 1, 1], [], []>} : vector<32x32xf32>, vector<32x128xf32>, vector<32x128xf32> -> vector<32x128xf32>
    %c32 = arith.constant 32 : index
    %c0_9 = arith.constant 0 : index
    %19 = vector.load %arg2[%c32, %c0_9] : memref<96x128xf32, #tpu.memory_space<vmem>>, vector<32x128xf32>
    %cst_10 = arith.constant dense<0.000000e+00> : vector<32x128xf32>
    %20 = tpu.matmul %15, %19, %cst_10 {dimension_numbers = #tpu.dot_dimension_numbers<[1], [0], [0], [1], [0, 0, 1, 1], [], []>} : vector<32x32xf32>, vector<32x128xf32>, vector<32x128xf32> -> vector<32x128xf32>
    %21 = arith.addf %18, %20 : vector<32x128xf32>
    %c64 = arith.constant 64 : index
    %c0_11 = arith.constant 0 : index
    %22 = vector.load %arg2[%c64, %c0_11] : memref<96x128xf32, #tpu.memory_space<vmem>>, vector<32x128xf32>
    %cst_12 = arith.constant dense<0.000000e+00> : vector<32x128xf32>
    %23 = tpu.matmul %16, %22, %cst_12 {dimension_numbers = #tpu.dot_dimension_numbers<[1], [0], [0], [1], [0, 0, 1, 1], [], []>} : vector<32x32xf32>, vector<32x128xf32>, vector<32x128xf32> -> vector<32x128xf32>
    %24 = arith.addf %21, %23 : vector<32x128xf32>
    %25 = vector.broadcast %14 : vector<1x128xf32> to vector<32x128xf32>
    %26 = arith.addf %24, %25 : vector<32x128xf32>
    %cst_13 = arith.constant 0.000000e+00 : f32
    %27 = vector.broadcast %cst_13 : f32 to vector<32x128xf32>
    %28 = arith.maximumf %26, %27 : vector<32x128xf32>
    %c1 = arith.constant 1 : index
    %c0_14 = arith.constant 0 : index
    %29 = vector.load %arg7[%c1, %c0_14] : memref<5x128xf32, #tpu.memory_space<vmem>>, vector<1x128xf32>
    %cst_15 = arith.constant dense<0.000000e+00> : vector<32x128xf32>
    %30 = tpu.matmul %6, %28, %cst_15 {dimension_numbers = #tpu.dot_dimension_numbers<[1], [0], [0], [1], [0, 0, 1, 1], [], []>} : vector<32x32xf32>, vector<32x128xf32>, vector<32x128xf32> -> vector<32x128xf32>
    %cst_16 = arith.constant dense<0.000000e+00> : vector<32x128xf32>
    %31 = tpu.matmul %11, %28, %cst_16 {dimension_numbers = #tpu.dot_dimension_numbers<[1], [0], [0], [1], [0, 0, 1, 1], [], []>} : vector<32x32xf32>, vector<32x128xf32>, vector<32x128xf32> -> vector<32x128xf32>
    %c0_17 = arith.constant 0 : index
    %c0_18 = arith.constant 0 : index
    %32 = vector.load %arg3[%c0_17, %c0_18] : memref<384x128xf32, #tpu.memory_space<vmem>>, vector<128x128xf32>
    %cst_19 = arith.constant dense<0.000000e+00> : vector<32x128xf32>
    %33 = tpu.matmul %28, %32, %cst_19 {dimension_numbers = #tpu.dot_dimension_numbers<[1], [0], [0], [1], [0, 0, 1, 1], [], []>} : vector<32x128xf32>, vector<128x128xf32>, vector<32x128xf32> -> vector<32x128xf32>
    %c128 = arith.constant 128 : index
    %c0_20 = arith.constant 0 : index
    %34 = vector.load %arg3[%c128, %c0_20] : memref<384x128xf32, #tpu.memory_space<vmem>>, vector<128x128xf32>
    %cst_21 = arith.constant dense<0.000000e+00> : vector<32x128xf32>
    %35 = tpu.matmul %30, %34, %cst_21 {dimension_numbers = #tpu.dot_dimension_numbers<[1], [0], [0], [1], [0, 0, 1, 1], [], []>} : vector<32x128xf32>, vector<128x128xf32>, vector<32x128xf32> -> vector<32x128xf32>
    %36 = arith.addf %33, %35 : vector<32x128xf32>
    %c256 = arith.constant 256 : index
    %c0_22 = arith.constant 0 : index
    %37 = vector.load %arg3[%c256, %c0_22] : memref<384x128xf32, #tpu.memory_space<vmem>>, vector<128x128xf32>
    %cst_23 = arith.constant dense<0.000000e+00> : vector<32x128xf32>
    %38 = tpu.matmul %31, %37, %cst_23 {dimension_numbers = #tpu.dot_dimension_numbers<[1], [0], [0], [1], [0, 0, 1, 1], [], []>} : vector<32x128xf32>, vector<128x128xf32>, vector<32x128xf32> -> vector<32x128xf32>
    %39 = arith.addf %36, %38 : vector<32x128xf32>
    %40 = vector.broadcast %29 : vector<1x128xf32> to vector<32x128xf32>
    %41 = arith.addf %39, %40 : vector<32x128xf32>
    %cst_24 = arith.constant 0.000000e+00 : f32
    %42 = vector.broadcast %cst_24 : f32 to vector<32x128xf32>
    %43 = arith.maximumf %41, %42 : vector<32x128xf32>
    %c2 = arith.constant 2 : index
    %c0_25 = arith.constant 0 : index
    %44 = vector.load %arg7[%c2, %c0_25] : memref<5x128xf32, #tpu.memory_space<vmem>>, vector<1x128xf32>
    %cst_26 = arith.constant dense<0.000000e+00> : vector<32x128xf32>
    %45 = tpu.matmul %6, %43, %cst_26 {dimension_numbers = #tpu.dot_dimension_numbers<[1], [0], [0], [1], [0, 0, 1, 1], [], []>} : vector<32x32xf32>, vector<32x128xf32>, vector<32x128xf32> -> vector<32x128xf32>
    %cst_27 = arith.constant dense<0.000000e+00> : vector<32x128xf32>
    %46 = tpu.matmul %11, %43, %cst_27 {dimension_numbers = #tpu.dot_dimension_numbers<[1], [0], [0], [1], [0, 0, 1, 1], [], []>} : vector<32x32xf32>, vector<32x128xf32>, vector<32x128xf32> -> vector<32x128xf32>
    %c0_28 = arith.constant 0 : index
    %c0_29 = arith.constant 0 : index
    %47 = vector.load %arg4[%c0_28, %c0_29] : memref<384x128xf32, #tpu.memory_space<vmem>>, vector<128x128xf32>
    %cst_30 = arith.constant dense<0.000000e+00> : vector<32x128xf32>
    %48 = tpu.matmul %43, %47, %cst_30 {dimension_numbers = #tpu.dot_dimension_numbers<[1], [0], [0], [1], [0, 0, 1, 1], [], []>} : vector<32x128xf32>, vector<128x128xf32>, vector<32x128xf32> -> vector<32x128xf32>
    %c128_31 = arith.constant 128 : index
    %c0_32 = arith.constant 0 : index
    %49 = vector.load %arg4[%c128_31, %c0_32] : memref<384x128xf32, #tpu.memory_space<vmem>>, vector<128x128xf32>
    %cst_33 = arith.constant dense<0.000000e+00> : vector<32x128xf32>
    %50 = tpu.matmul %45, %49, %cst_33 {dimension_numbers = #tpu.dot_dimension_numbers<[1], [0], [0], [1], [0, 0, 1, 1], [], []>} : vector<32x128xf32>, vector<128x128xf32>, vector<32x128xf32> -> vector<32x128xf32>
    %51 = arith.addf %48, %50 : vector<32x128xf32>
    %c256_34 = arith.constant 256 : index
    %c0_35 = arith.constant 0 : index
    %52 = vector.load %arg4[%c256_34, %c0_35] : memref<384x128xf32, #tpu.memory_space<vmem>>, vector<128x128xf32>
    %cst_36 = arith.constant dense<0.000000e+00> : vector<32x128xf32>
    %53 = tpu.matmul %46, %52, %cst_36 {dimension_numbers = #tpu.dot_dimension_numbers<[1], [0], [0], [1], [0, 0, 1, 1], [], []>} : vector<32x128xf32>, vector<128x128xf32>, vector<32x128xf32> -> vector<32x128xf32>
    %54 = arith.addf %51, %53 : vector<32x128xf32>
    %55 = vector.broadcast %44 : vector<1x128xf32> to vector<32x128xf32>
    %56 = arith.addf %54, %55 : vector<32x128xf32>
    %cst_37 = arith.constant 0.000000e+00 : f32
    %57 = vector.broadcast %cst_37 : f32 to vector<32x128xf32>
    %58 = arith.maximumf %56, %57 : vector<32x128xf32>
    %c3 = arith.constant 3 : index
    %c0_38 = arith.constant 0 : index
    %59 = vector.load %arg7[%c3, %c0_38] : memref<5x128xf32, #tpu.memory_space<vmem>>, vector<1x128xf32>
    %cst_39 = arith.constant dense<0.000000e+00> : vector<32x128xf32>
    %60 = tpu.matmul %6, %58, %cst_39 {dimension_numbers = #tpu.dot_dimension_numbers<[1], [0], [0], [1], [0, 0, 1, 1], [], []>} : vector<32x32xf32>, vector<32x128xf32>, vector<32x128xf32> -> vector<32x128xf32>
    %cst_40 = arith.constant dense<0.000000e+00> : vector<32x128xf32>
    %61 = tpu.matmul %11, %58, %cst_40 {dimension_numbers = #tpu.dot_dimension_numbers<[1], [0], [0], [1], [0, 0, 1, 1], [], []>} : vector<32x32xf32>, vector<32x128xf32>, vector<32x128xf32> -> vector<32x128xf32>
    %c0_41 = arith.constant 0 : index
    %c0_42 = arith.constant 0 : index
    %62 = vector.load %arg5[%c0_41, %c0_42] : memref<384x128xf32, #tpu.memory_space<vmem>>, vector<128x128xf32>
    %cst_43 = arith.constant dense<0.000000e+00> : vector<32x128xf32>
    %63 = tpu.matmul %58, %62, %cst_43 {dimension_numbers = #tpu.dot_dimension_numbers<[1], [0], [0], [1], [0, 0, 1, 1], [], []>} : vector<32x128xf32>, vector<128x128xf32>, vector<32x128xf32> -> vector<32x128xf32>
    %c128_44 = arith.constant 128 : index
    %c0_45 = arith.constant 0 : index
    %64 = vector.load %arg5[%c128_44, %c0_45] : memref<384x128xf32, #tpu.memory_space<vmem>>, vector<128x128xf32>
    %cst_46 = arith.constant dense<0.000000e+00> : vector<32x128xf32>
    %65 = tpu.matmul %60, %64, %cst_46 {dimension_numbers = #tpu.dot_dimension_numbers<[1], [0], [0], [1], [0, 0, 1, 1], [], []>} : vector<32x128xf32>, vector<128x128xf32>, vector<32x128xf32> -> vector<32x128xf32>
    %66 = arith.addf %63, %65 : vector<32x128xf32>
    %c256_47 = arith.constant 256 : index
    %c0_48 = arith.constant 0 : index
    %67 = vector.load %arg5[%c256_47, %c0_48] : memref<384x128xf32, #tpu.memory_space<vmem>>, vector<128x128xf32>
    %cst_49 = arith.constant dense<0.000000e+00> : vector<32x128xf32>
    %68 = tpu.matmul %61, %67, %cst_49 {dimension_numbers = #tpu.dot_dimension_numbers<[1], [0], [0], [1], [0, 0, 1, 1], [], []>} : vector<32x128xf32>, vector<128x128xf32>, vector<32x128xf32> -> vector<32x128xf32>
    %69 = arith.addf %66, %68 : vector<32x128xf32>
    %70 = vector.broadcast %59 : vector<1x128xf32> to vector<32x128xf32>
    %71 = arith.addf %69, %70 : vector<32x128xf32>
    %cst_50 = arith.constant 0.000000e+00 : f32
    %72 = vector.broadcast %cst_50 : f32 to vector<32x128xf32>
    %73 = arith.maximumf %71, %72 : vector<32x128xf32>
    %c4 = arith.constant 4 : index
    %c0_51 = arith.constant 0 : index
    %74 = vector.load %arg7[%c4, %c0_51] : memref<5x128xf32, #tpu.memory_space<vmem>>, vector<1x128xf32>
    %cst_52 = arith.constant dense<0.000000e+00> : vector<32x128xf32>
    %75 = tpu.matmul %6, %73, %cst_52 {dimension_numbers = #tpu.dot_dimension_numbers<[1], [0], [0], [1], [0, 0, 1, 1], [], []>} : vector<32x32xf32>, vector<32x128xf32>, vector<32x128xf32> -> vector<32x128xf32>
    %cst_53 = arith.constant dense<0.000000e+00> : vector<32x128xf32>
    %76 = tpu.matmul %11, %73, %cst_53 {dimension_numbers = #tpu.dot_dimension_numbers<[1], [0], [0], [1], [0, 0, 1, 1], [], []>} : vector<32x32xf32>, vector<32x128xf32>, vector<32x128xf32> -> vector<32x128xf32>
    %c0_54 = arith.constant 0 : index
    %c0_55 = arith.constant 0 : index
    %77 = vector.load %arg6[%c0_54, %c0_55] : memref<384x128xf32, #tpu.memory_space<vmem>>, vector<128x128xf32>
    %cst_56 = arith.constant dense<0.000000e+00> : vector<32x128xf32>
    %78 = tpu.matmul %73, %77, %cst_56 {dimension_numbers = #tpu.dot_dimension_numbers<[1], [0], [0], [1], [0, 0, 1, 1], [], []>} : vector<32x128xf32>, vector<128x128xf32>, vector<32x128xf32> -> vector<32x128xf32>
    %c128_57 = arith.constant 128 : index
    %c0_58 = arith.constant 0 : index
    %79 = vector.load %arg6[%c128_57, %c0_58] : memref<384x128xf32, #tpu.memory_space<vmem>>, vector<128x128xf32>
    %cst_59 = arith.constant dense<0.000000e+00> : vector<32x128xf32>
    %80 = tpu.matmul %75, %79, %cst_59 {dimension_numbers = #tpu.dot_dimension_numbers<[1], [0], [0], [1], [0, 0, 1, 1], [], []>} : vector<32x128xf32>, vector<128x128xf32>, vector<32x128xf32> -> vector<32x128xf32>
    %81 = arith.addf %78, %80 : vector<32x128xf32>
    %c256_60 = arith.constant 256 : index
    %c0_61 = arith.constant 0 : index
    %82 = vector.load %arg6[%c256_60, %c0_61] : memref<384x128xf32, #tpu.memory_space<vmem>>, vector<128x128xf32>
    %cst_62 = arith.constant dense<0.000000e+00> : vector<32x128xf32>
    %83 = tpu.matmul %76, %82, %cst_62 {dimension_numbers = #tpu.dot_dimension_numbers<[1], [0], [0], [1], [0, 0, 1, 1], [], []>} : vector<32x128xf32>, vector<128x128xf32>, vector<32x128xf32> -> vector<32x128xf32>
    %84 = arith.addf %81, %83 : vector<32x128xf32>
    %85 = vector.broadcast %74 : vector<1x128xf32> to vector<32x128xf32>
    %86 = arith.addf %84, %85 : vector<32x128xf32>
    %cst_63 = arith.constant 0.000000e+00 : f32
    %87 = vector.broadcast %cst_63 : f32 to vector<32x128xf32>
    %88 = arith.maximumf %86, %87 : vector<32x128xf32>
    %cst_64 = arith.constant dense<0.000000e+00> : vector<128xf32>
    %89 = vector.multi_reduction <add>, %88, %cst_64 [0] : vector<32x128xf32> to vector<128xf32>
    %90 = vector.shape_cast %89 : vector<128xf32> to vector<1x128xf32>
    %cst_65 = arith.constant 3.200000e+01 : f32
    %91 = vector.broadcast %cst_65 : f32 to vector<1x128xf32>
    %92 = arith.divf %90, %91 : vector<1x128xf32>
    %93 = arith.mulf %92, %92 : vector<1x128xf32>
    %cst_66 = arith.constant dense<0.000000e+00> : vector<1xf32>
    %94 = vector.multi_reduction <add>, %93, %cst_66 [1] : vector<1x128xf32> to vector<1xf32>
    %95 = vector.shape_cast %94 : vector<1xf32> to vector<1x1xf32>
    %cst_67 = arith.constant 1.000000e-24 : f32
    %96 = vector.broadcast %cst_67 : f32 to vector<1x1xf32>
    %97 = arith.maximumf %95, %96 : vector<1x1xf32>
    %98 = math.rsqrt %97 : vector<1x1xf32>
    %99 = vector.broadcast %98 : vector<1x1xf32> to vector<1x128xf32>
    %100 = arith.mulf %92, %99 : vector<1x128xf32>
    %c0_68 = arith.constant 0 : index
    %c0_69 = arith.constant 0 : index
    %101 = vector.load %arg8[%c0_68, %c0_69] : memref<1x128xf32, #tpu.memory_space<vmem>>, vector<1x128xf32>
    %102 = arith.mulf %100, %101 : vector<1x128xf32>
    %c0_70 = arith.constant 0 : index
    %c0_71 = arith.constant 0 : index
    %103 = vector.load %arg9[%c0_70, %c0_71] : memref<1x128xf32, #tpu.memory_space<vmem>>, vector<1x128xf32>
    %104 = arith.addf %102, %103 : vector<1x128xf32>
    %cst_72 = arith.constant 0.000000e+00 : f32
    %105 = vector.broadcast %cst_72 : f32 to vector<1x128xf32>
    %106 = arith.cmpf oge, %104, %105 : vector<1x128xf32>
    %cst_73 = arith.constant 0.00999999977 : f32
    %107 = vector.broadcast %cst_73 : f32 to vector<1x128xf32>
    %108 = arith.mulf %107, %104 : vector<1x128xf32>
    %109 = arith.select %106, %104, %108 : vector<1x128xi1>, vector<1x128xf32>
    %c0_74 = arith.constant 0 : index
    %c0_75 = arith.constant 0 : index
    %110 = vector.load %arg10[%c0_74, %c0_75] : memref<128x3xf32, #tpu.memory_space<vmem>>, vector<128x3xf32>
    %cst_76 = arith.constant dense<0.000000e+00> : vector<1x3xf32>
    %111 = tpu.matmul %109, %110, %cst_76 {dimension_numbers = #tpu.dot_dimension_numbers<[1], [0], [0], [1], [0, 0, 1, 1], [], []>} : vector<1x128xf32>, vector<128x3xf32>, vector<1x3xf32> -> vector<1x3xf32>
    %c0_77 = arith.constant 0 : index
    %c0_78 = arith.constant 0 : index
    %112 = vector.load %arg11[%c0_77, %c0_78] : memref<1x3xf32, #tpu.memory_space<vmem>>, vector<1x3xf32>
    %113 = arith.addf %111, %112 : vector<1x3xf32>
    %cst_79 = arith.constant dense<0xFF800000> : vector<1xf32>
    %114 = vector.multi_reduction <maximumf>, %113, %cst_79 [1] : vector<1x3xf32> to vector<1xf32>
    %115 = vector.shape_cast %114 : vector<1xf32> to vector<1x1xf32>
    %116 = vector.broadcast %115 : vector<1x1xf32> to vector<1x3xf32>
    %117 = arith.subf %113, %116 : vector<1x3xf32>
    %118 = math.exp %117 : vector<1x3xf32>
    %cst_80 = arith.constant dense<0.000000e+00> : vector<1xf32>
    %119 = vector.multi_reduction <add>, %118, %cst_80 [1] : vector<1x3xf32> to vector<1xf32>
    %120 = vector.shape_cast %119 : vector<1xf32> to vector<1x1xf32>
    %121 = vector.broadcast %120 : vector<1x1xf32> to vector<1x3xf32>
    %122 = arith.divf %118, %121 : vector<1x3xf32>
    %c0_81 = arith.constant 0 : index
    %c0_82 = arith.constant 0 : index
    %c0_83 = arith.constant 0 : index
    %123 = vector.load %arg12[%c0_81, %c0_82, %c0_83] : memref<1x1x3xf32, #tpu.memory_space<vmem>>, vector<1x1x3xf32>
    %124 = vector.shape_cast %123 : vector<1x1x3xf32> to vector<1x3xf32>
    %125 = vector.shape_cast %122 : vector<1x3xf32> to vector<1x1x3xf32>
    tpu.vector_store %arg12[%c0_81, %c0_82, %c0_83], %125 {strides = array<i32>} : memref<1x1x3xf32, #tpu.memory_space<vmem>>, vector<1x1x3xf32>,
    return
  }
  func.func @transform_0(%arg0: i32) -> (i32, i32, i32) {
    %c0_i32 = arith.constant 0 : i32
    %c0_i32_0 = arith.constant 0 : i32
    %c0_i32_1 = arith.constant 0 : i32
    return %arg0, %c0_i32, %c0_i32_0 : i32, i32, i32
  }
  func.func @transform_1(%arg0: i32) -> (i32, i32) {
    %c0_i32 = arith.constant 0 : i32
    %c0_i32_0 = arith.constant 0 : i32
    %c0_i32_1 = arith.constant 0 : i32
    return %c0_i32, %c0_i32_0 : i32, i32
  }
  func.func @transform_2(%arg0: i32) -> (i32, i32) {
    %c0_i32 = arith.constant 0 : i32
    %c0_i32_0 = arith.constant 0 : i32
    %c0_i32_1 = arith.constant 0 : i32
    return %c0_i32, %c0_i32_0 : i32, i32
  }
  func.func @transform_3(%arg0: i32) -> (i32, i32) {
    %c0_i32 = arith.constant 0 : i32
    %c0_i32_0 = arith.constant 0 : i32
    %c0_i32_1 = arith.constant 0 : i32
    return %c0_i32, %c0_i32_0 : i32, i32
  }
  func.func @transform_4(%arg0: i32) -> (i32, i32) {
    %c0_i32 = arith.constant 0 : i32
    %c0_i32_0 = arith.constant 0 : i32
    %c0_i32_1 = arith.constant 0 : i32
    return %c0_i32, %c0_i32_0 : i32, i32
  }
  func.func @transform_5(%arg0: i32) -> (i32, i32) {
    %c0_i32 = arith.constant 0 : i32
    %c0_i32_0 = arith.constant 0 : i32
    %c0_i32_1 = arith.constant 0 : i32
    return %c0_i32, %c0_i32_0 : i32, i32
  }
  func.func @transform_6(%arg0: i32) -> (i32, i32) {
    %c0_i32 = arith.constant 0 : i32
    %c0_i32_0 = arith.constant 0 : i32
    %c0_i32_1 = arith.constant 0 : i32
    return %c0_i32, %c0_i32_0 : i32, i32
  }
  func.func @transform_7(%arg0: i32) -> (i32, i32) {
    %c0_i32 = arith.constant 0 : i32
    %c0_i32_0 = arith.constant 0 : i32
    %c0_i32_1 = arith.constant 0 : i32
    return %c0_i32, %c0_i32_0 : i32, i32
  }
  func.func @transform_8(%arg0: i32) -> (i32, i32) {
    %c0_i32 = arith.constant 0 : i32
    %c0_i32_0 = arith.constant 0 : i32
    %c0_i32_1 = arith.constant 0 : i32
    return %c0_i32, %c0_i32_0 : i32, i32
  }
  func.func @transform_9(%arg0: i32) -> (i32, i32) {
    %c0_i32 = arith.constant 0 : i32
    %c0_i32_0 = arith.constant 0 : i32
    %c0_i32_1 = arith.constant 0 : i32
    return %c0_i32, %c0_i32_0 : i32, i32
  }
  func.func @transform_10(%arg0: i32) -> (i32, i32) {
    %c0_i32 = arith.constant 0 : i32
    %c0_i32_0 = arith.constant 0 : i32
    %c0_i32_1 = arith.constant 0 : i32
    return %c0_i32, %c0_i32_0 : i32, i32
  }
  func.func @transform_11(%arg0: i32) -> (i32, i32, i32) {
    %c0_i32 = arith.constant 0 : i32
    %c0_i32_0 = arith.constant 0 : i32
    %c0_i32_1 = arith.constant 0 : i32
    return %arg0, %c0_i32, %c0_i32_0 : i32, i32, i32
  }
}

</mosaic_0001>

<llo_original>
// kernel: tile.24
$region0: #{tile.24}
  #allocation0 [shape = 's32[1]{0}', space=sflag, size = 0x4, scoped, tag = 'scoped memory for tile.24']
  %s0 = inlined_call_operand.vmem [shape: f32[8], index: 0, kind: input, shape index: {}]
  %s1 = inlined_call_operand.vmem [shape: f32[16,8], index: 1, kind: output, shape index: {}]
  // Predicated region
  $region2: #{tile.24} parent=0 // pred_check
    _
  $region3: #{tile.24} parent=0 // pred_check_branch
    %3 = sbr.rel (0) target = $region5
  $region4: #{tile.24} parent=0 // pred_region
    _
  $region5: #{tile.24} parent=0 // pred_fallthru
    _
  %v4 = vld [vmem:[%s0] ss:$0 sm:$0xff]
  %5 = vst [vmem:[%s1] sm:$0xff] %v4
  %s6 = scalar_lea.vmem %s1, 8
  %7 = vst [vmem:[%s6] sm:$0xff] %v4

// kernel: tile.38
$region0: #{tile.38}
  %s0 = inlined_call_operand.vmem [shape: f32[16,8], index: 0, kind: input, shape index: {}]
  %s1 = inlined_call_operand.vmem [shape: f32[1,128], index: 1, kind: output, shape index: {}]
  $region1: #{tile.38} parent=0
    #allocation0 [shape = 'u8[4096]{0}', space=vmem, size = 0x1000, scoped, tag = 'scoped mem for output reshape']
    %v2 = vld [vmem:[%s0] sm:$0x1]
    %vm3 = vcmask 64512
    %4 = vst.msk [vmem:[#allocation0] sm:$0x1] %vm3, %v2
    %s5 = scalar_lea.vmem %s0, 15
    %v6 = vld [vmem:[%s5] sm:$0x1]
    %7 = vrot.lane.b32.xlu0 %v6, 120
    %v8 = vpop.permute.xlu0 %7
    %vm9 = vcmask 1048512
    %10 = vst.msk [vmem:[#allocation0] sm:$0x1] %vm9, %v8
    %s11 = scalar_lea.vmem %s0, 14
    %v12 = vld [vmem:[%s11] sm:$0x1]
    %13 = vrot.lane.b32.xlu0 %v12, 112
    %v14 = vpop.permute.xlu0 %13
    %vm15 = vcmask 982912
    %16 = vst.msk [vmem:[#allocation0] sm:$0x1] %vm15, %v14
    %s17 = scalar_lea.vmem %s0, 13
    %v18 = vld [vmem:[%s17] sm:$0x1]
    %19 = vrot.lane.b32.xlu0 %v18, 104
    %v20 = vpop.permute.xlu0 %19
    %vm21 = vcmask 917312
    %22 = vst.msk [vmem:[#allocation0] sm:$0x1] %vm21, %v20
    %s23 = scalar_lea.vmem %s0, 12
    %v24 = vld [vmem:[%s23] sm:$0x1]
    %25 = vrot.lane.b32.xlu0 %v24, 96
    %v26 = vpop.permute.xlu0 %25
    %vm27 = vcmask 851712
    %28 = vst.msk [vmem:[#allocation0] sm:$0x1] %vm27, %v26
    %s29 = scalar_lea.vmem %s0, 11
    %v30 = vld [vmem:[%s29] sm:$0x1]
    %31 = vrot.lane.b32.xlu0 %v30, 88
    %v32 = vpop.permute.xlu0 %31
    %vm33 = vcmask 786112
    %34 = vst.msk [vmem:[#allocation0] sm:$0x1] %vm33, %v32
    %s35 = scalar_lea.vmem %s0, 10
    %v36 = vld [vmem:[%s35] sm:$0x1]
    %37 = vrot.lane.b32.xlu0 %v36, 80
    %v38 = vpop.permute.xlu0 %37
    %vm39 = vcmask 720512
    %40 = vst.msk [vmem:[#allocation0] sm:$0x1] %vm39, %v38
    %s41 = scalar_lea.vmem %s0, 9
    %v42 = vld [vmem:[%s41] sm:$0x1]
    %43 = vrot.lane.b32.xlu0 %v42, 72
    %v44 = vpop.permute.xlu0 %43
    %vm45 = vcmask 654912
    %46 = vst.msk [vmem:[#allocation0] sm:$0x1] %vm45, %v44
    %s47 = scalar_lea.vmem %s0, 8
    %v48 = vld [vmem:[%s47] sm:$0x1]
    %49 = vrot.lane.b32.xlu0 %v48, 64
    %v50 = vpop.permute.xlu0 %49
    %vm51 = vcmask 589312
    %52 = vst.msk [vmem:[#allocation0] sm:$0x1] %vm51, %v50
    %s53 = scalar_lea.vmem %s0, 7
    %v54 = vld [vmem:[%s53] sm:$0x1]
    %55 = vrot.lane.b32.xlu0 %v54, 56
    %v56 = vpop.permute.xlu0 %55
    %vm57 = vcmask 523712
    %58 = vst.msk [vmem:[#allocation0] sm:$0x1] %vm57, %v56
    %s59 = scalar_lea.vmem %s0, 6
    %v60 = vld [vmem:[%s59] sm:$0x1]
    %61 = vrot.lane.b32.xlu0 %v60, 48
    %v62 = vpop.permute.xlu0 %61
    %vm63 = vcmask 458112
    %64 = vst.msk [vmem:[#allocation0] sm:$0x1] %vm63, %v62
    %s65 = scalar_lea.vmem %s0, 5
    %v66 = vld [vmem:[%s65] sm:$0x1]
    %67 = vrot.lane.b32.xlu0 %v66, 40
    %v68 = vpop.permute.xlu0 %67
    %vm69 = vcmask 392512
    %70 = vst.msk [vmem:[#allocation0] sm:$0x1] %vm69, %v68
    %s71 = scalar_lea.vmem %s0, 4
    %v72 = vld [vmem:[%s71] sm:$0x1]
    %73 = vrot.lane.b32.xlu0 %v72, 32
    %v74 = vpop.permute.xlu0 %73
    %vm75 = vcmask 326912
    %76 = vst.msk [vmem:[#allocation0] sm:$0x1] %vm75, %v74
    %s77 = scalar_lea.vmem %s0, 3
    %v78 = vld [vmem:[%s77] sm:$0x1]
    %79 = vrot.lane.b32.xlu0 %v78, 24
    %v80 = vpop.permute.xlu0 %79
    %vm81 = vcmask 261312
    %82 = vst.msk [vmem:[#allocation0] sm:$0x1] %vm81, %v80
    %s83 = scalar_lea.vmem %s0, 2
    %v84 = vld [vmem:[%s83] sm:$0x1]
    %85 = vrot.lane.b32.xlu0 %v84, 16
    %v86 = vpop.permute.xlu0 %85
    %vm87 = vcmask 195712
    %88 = vst.msk [vmem:[#allocation0] sm:$0x1] %vm87, %v86
    %s89 = scalar_lea.vmem %s0, 1
    %v90 = vld [vmem:[%s89] sm:$0x1]
    %91 = vrot.lane.b32.xlu0 %v90, 8
    %v92 = vpop.permute.xlu0 %91
    %vm93 = vcmask 130112
    %94 = vst.msk [vmem:[#allocation0] sm:$0x1] %vm93, %v92
    %s96 = ssub.s32 2, 1
    %v97 = vld [vmem:[#allocation0] sm:%s96]
    %s99 = ssub.s32 2, 1
    %100 = vst [vmem:[%s1] sm:%s99] %v97

// kernel: tile.28
$region0: #{tile.28}
  #allocation0 [shape = 's32[1]{0}', space=sflag, size = 0x4, scoped, tag = 'scoped memory for tile.28']
  %s0 = inlined_call_operand.vmem [shape: f32[16], index: 0, kind: input, shape index: {}]
  %s1 = inlined_call_operand.vmem [shape: f32[8,16], index: 1, kind: output, shape index: {}]
  // Predicated region
  $region2: #{tile.28} parent=0 // pred_check
    _
  $region3: #{tile.28} parent=0 // pred_check_branch
    %3 = sbr.rel (0) target = $region5
  $region4: #{tile.28} parent=0 // pred_region
    _
  $region5: #{tile.28} parent=0 // pred_fallthru
    _
  %v4 = vld [vmem:[%s0] ss:$0 sm:$0xff]
  %5 = vst [vmem:[%s1] sm:$0xff] %v4

// kernel: tile.39
$region0: #{tile.39}
  %s0 = inlined_call_operand.vmem [shape: f32[8,16], index: 0, kind: input, shape index: {}]
  %s1 = inlined_call_operand.vmem [shape: f32[1,128], index: 1, kind: output, shape index: {}]
  $region1: #{tile.39} parent=0
    #allocation0 [shape = 'u8[4096]{0}', space=vmem, size = 0x1000, scoped, tag = 'scoped mem for output reshape']
    %v2 = vld [vmem:[%s0] sm:$0x1]
    %vm3 = vcmask 130048
    %4 = vst.msk [vmem:[#allocation0] sm:$0x1] %vm3, %v2
    %s5 = scalar_lea.vmem %s0, 7
    %v6 = vld [vmem:[%s5] sm:$0x1]
    %7 = vrot.lane.b32.xlu0 %v6, 112
    %v8 = vpop.permute.xlu0 %7
    %vm9 = vcmask 1048448
    %10 = vst.msk [vmem:[#allocation0] sm:$0x1] %vm9, %v8
    %s11 = scalar_lea.vmem %s0, 6
    %v12 = vld [vmem:[%s11] sm:$0x1]
    %13 = vrot.lane.b32.xlu0 %v12, 96
    %v14 = vpop.permute.xlu0 %13
    %vm15 = vcmask 917248
    %16 = vst.msk [vmem:[#allocation0] sm:$0x1] %vm15, %v14
    %s17 = scalar_lea.vmem %s0, 5
    %v18 = vld [vmem:[%s17] sm:$0x1]
    %19 = vrot.lane.b32.xlu0 %v18, 80
    %v20 = vpop.permute.xlu0 %19
    %vm21 = vcmask 786048
    %22 = vst.msk [vmem:[#allocation0] sm:$0x1] %vm21, %v20
    %s23 = scalar_lea.vmem %s0, 4
    %v24 = vld [vmem:[%s23] sm:$0x1]
    %25 = vrot.lane.b32.xlu0 %v24, 64
    %v26 = vpop.permute.xlu0 %25
    %vm27 = vcmask 654848
    %28 = vst.msk [vmem:[#allocation0] sm:$0x1] %vm27, %v26
    %s29 = scalar_lea.vmem %s0, 3
    %v30 = vld [vmem:[%s29] sm:$0x1]
    %31 = vrot.lane.b32.xlu0 %v30, 48
    %v32 = vpop.permute.xlu0 %31
    %vm33 = vcmask 523648
    %34 = vst.msk [vmem:[#allocation0] sm:$0x1] %vm33, %v32
    %s35 = scalar_lea.vmem %s0, 2
    %v36 = vld [vmem:[%s35] sm:$0x1]
    %37 = vrot.lane.b32.xlu0 %v36, 32
    %v38 = vpop.permute.xlu0 %37
    %vm39 = vcmask 392448
    %40 = vst.msk [vmem:[#allocation0] sm:$0x1] %vm39, %v38
    %s41 = scalar_lea.vmem %s0, 1
    %v42 = vld [vmem:[%s41] sm:$0x1]
    %43 = vrot.lane.b32.xlu0 %v42, 16
    %v44 = vpop.permute.xlu0 %43
    %vm45 = vcmask 261248
    %46 = vst.msk [vmem:[#allocation0] sm:$0x1] %vm45, %v44
    %s48 = ssub.s32 2, 1
    %v49 = vld [vmem:[#allocation0] sm:%s48]
    %s51 = ssub.s32 2, 1
    %52 = vst [vmem:[%s1] sm:%s51] %v49

// kernel: tile.32
$region0: #{tile.32}
  #allocation0 [shape = 's32[1]{0}', space=sflag, size = 0x4, scoped, tag = 'scoped memory for tile.32']
  %s0 = inlined_call_operand.vmem [shape: f32[32], index: 0, kind: input, shape index: {}]
  %s1 = inlined_call_operand.vmem [shape: f32[4,32], index: 1, kind: output, shape index: {}]
  // Predicated region
  $region2: #{tile.32} parent=0 // pred_check
    _
  $region3: #{tile.32} parent=0 // pred_check_branch
    %3 = sbr.rel (0) target = $region5
  $region4: #{tile.32} parent=0 // pred_region
    _
  $region5: #{tile.32} parent=0 // pred_fallthru
    _
  %v4 = vld [vmem:[%s0] ss:$0 sm:$0xff]
  %5 = vst [vmem:[%s1] sm:$0xf] %v4

// kernel: tile.40
$region0: #{tile.40}
  %s0 = inlined_call_operand.vmem [shape: f32[4,32], index: 0, kind: input, shape index: {}]
  %s1 = inlined_call_operand.vmem [shape: f32[1,128], index: 1, kind: output, shape index: {}]
  $region1: #{tile.40} parent=0
    #allocation0 [shape = 'u8[4096]{0}', space=vmem, size = 0x1000, scoped, tag = 'scoped mem for output reshape']
    #allocation1 [shape = 'u8[4096]{0}', space=vmem, size = 0x1000, scoped, tag = 'scoped mem for input reshape']
    %s3 = ssub.s32 16, 1
    %v4 = vld [vmem:[%s0] sm:%s3]
    %5 = vst [vmem:[#allocation1] sm:%s3] %v4
    %v6 = vld [vmem:[#allocation1] sm:$0x1]
    %vm7 = vcmask 261120
    %8 = vst.msk [vmem:[#allocation0] sm:$0x1] %vm7, %v6
    %s9 = scalar_lea.vmem [#allocation1], 3
    %v10 = vld [vmem:[%s9] sm:$0x1]
    %11 = vrot.lane.b32.xlu0 %v10, 96
    %v12 = vpop.permute.xlu0 %11
    %vm13 = vcmask 1048320
    %14 = vst.msk [vmem:[#allocation0] sm:$0x1] %vm13, %v12
    %s15 = scalar_lea.vmem [#allocation1], 2
    %v16 = vld [vmem:[%s15] sm:$0x1]
    %17 = vrot.lane.b32.xlu0 %v16, 64
    %v18 = vpop.permute.xlu0 %17
    %vm19 = vcmask 785920
    %20 = vst.msk [vmem:[#allocation0] sm:$0x1] %vm19, %v18
    %s21 = scalar_lea.vmem [#allocation1], 1
    %v22 = vld [vmem:[%s21] sm:$0x1]
    %23 = vrot.lane.b32.xlu0 %v22, 32
    %v24 = vpop.permute.xlu0 %23
    %vm25 = vcmask 523520
    %26 = vst.msk [vmem:[#allocation0] sm:$0x1] %vm25, %v24
    %s28 = ssub.s32 2, 1
    %v29 = vld [vmem:[#allocation0] sm:%s28]
    %s31 = ssub.s32 2, 1
    %32 = vst [vmem:[%s1] sm:%s31] %v29

// kernel: tile.36
$region0: #{tile.36}
  #allocation0 [shape = 's32[1]{0}', space=sflag, size = 0x4, scoped, tag = 'scoped memory for tile.36']
  %s0 = inlined_call_operand.vmem [shape: f32[64], index: 0, kind: input, shape index: {}]
  %s1 = inlined_call_operand.vmem [shape: f32[2,64], index: 1, kind: output, shape index: {}]
  // Predicated region
  $region2: #{tile.36} parent=0 // pred_check
    _
  $region3: #{tile.36} parent=0 // pred_check_branch
    %3 = sbr.rel (0) target = $region5
  $region4: #{tile.36} parent=0 // pred_region
    _
  $region5: #{tile.36} parent=0 // pred_fallthru
    _
  %v4 = vld [vmem:[%s0] ss:$0 sm:$0xff]
  %5 = vst [vmem:[%s1] sm:$0x3] %v4

// kernel: tile.41
$region0: #{tile.41}
  %s0 = inlined_call_operand.vmem [shape: f32[2,64], index: 0, kind: input, shape index: {}]
  %s1 = inlined_call_operand.vmem [shape: f32[1,128], index: 1, kind: output, shape index: {}]
  $region1: #{tile.41} parent=0
    #allocation0 [shape = 'u8[4096]{0}', space=vmem, size = 0x1000, scoped, tag = 'scoped mem for output reshape']
    #allocation1 [shape = 'u8[4096]{0}', space=vmem, size = 0x1000, scoped, tag = 'scoped mem for input reshape']
    %s3 = ssub.s32 4, 1
    %v4 = vld [vmem:[%s0] sm:%s3]
    %5 = vst [vmem:[#allocation1] sm:%s3] %v4
    %v6 = vld [vmem:[#allocation1] sm:$0x1]
    %vm7 = vcmask 523264
    %8 = vst.msk [vmem:[#allocation0] sm:$0x1] %vm7, %v6
    %s9 = scalar_lea.vmem [#allocation1], 1
    %v10 = vld [vmem:[%s9] sm:$0x1]
    %11 = vrot.lane.b32.xlu0 %v10, 64
    %v12 = vpop.permute.xlu0 %11
    %vm13 = vcmask 1048064
    %14 = vst.msk [vmem:[#allocation0] sm:$0x1] %vm13, %v12
    %s16 = ssub.s32 2, 1
    %v17 = vld [vmem:[#allocation0] sm:%s16]
    %s19 = ssub.s32 2, 1
    %20 = vst [vmem:[%s1] sm:%s19] %v17

// kernel: time_conv_forward.1
$region0: #{time_conv_forward.1}
  #allocation0 [shape = 'u32[]', space=smem, size = 0x4, offset = 0x4, fixed_abs, tag = 'smem constant byte address 0x4 - core index']
  #allocation1 [shape = 'u32[72,128]{1,0:T(1,128)}', space=vmem, size = 0x9000, scoped, tag = 'internal scratch']
  %s0 = inlined_call_operand.vmem [shape: f32[2,32,32], index: 0, kind: input, shape index: {}]
  %s1 = inlined_call_operand.vmem [shape: f32[96,128], index: 1, kind: input, shape index: {}]
  %s2 = inlined_call_operand.vmem [shape: f32[384,128], index: 2, kind: input, shape index: {}]
  %s3 = inlined_call_operand.vmem [shape: f32[384,128], index: 3, kind: input, shape index: {}]
  %s4 = inlined_call_operand.vmem [shape: f32[384,128], index: 4, kind: input, shape index: {}]
  %s5 = inlined_call_operand.vmem [shape: f32[384,128], index: 5, kind: input, shape index: {}]
  %s6 = inlined_call_operand.vmem [shape: f32[5,128], index: 6, kind: input, shape index: {}]
  %s7 = inlined_call_operand.vmem [shape: f32[1,128], index: 7, kind: input, shape index: {}]
  %s8 = inlined_call_operand.vmem [shape: f32[1,128], index: 8, kind: input, shape index: {}]
  %s9 = inlined_call_operand.vmem [shape: f32[128,3], index: 9, kind: input, shape index: {}]
  %s10 = inlined_call_operand.vmem [shape: f32[1,3], index: 10, kind: input, shape index: {}]
  %s11 = inlined_call_operand.hbm [shape: f32[2,1,3], index: 11, kind: output, shape index: {}]
  %s12 = sld [smem:[#allocation0]]
  $region77: #{time_conv_forward.1} parent=0
    _
  %s14 = ssub.s32 1, %s12
  %s15 = scalar_select 0, %s14, %s12
  $region1: #{time_conv_forward.1} parent=0
    #allocation2 [shape = 'u8[1024]{0}', space=vmem, size = 0x400, scoped, tag = 'output window, operand 0']
    #allocation3 [shape = 's32[2]{0}', space=sflag, size = 0x8, scoped, tag = 'scoped memory for time_conv_forward.1']
    %16 = vsyncpa [#allocation3], 0
    %s17 = scalar_lea.sflag [#allocation3], 1
    %18 = vsyncpa %s17, 0
    loop: start=0, step=1, limit=4
    $region2: #{time_conv_forward.1} parent=1 // loop_pre_header
      _
    $region3: #{time_conv_forward.1} parent=1 // loop_header
      %s20 = sphi 0, %s24
      %p21 = scmp.ge.s32.totalorder %s20, 4
      %s30 = sphi 0, %s32
      %s33 = sphi 0, %s30
      %s34 = sphi 0, %s33
      %s50 = sphi 0, %s34
      %s54 = sphi 0, %s54
      %s56 = sphi 0, %s54
      %s57 = sphi 0, %s56
      %s71 = sphi 0, %s57
      %s75 = sphi 0, %s75
      %s77 = sphi 0, %s75
      %s78 = sphi 0, %s77
      %s92 = sphi 0, %s78
      %s96 = sphi 0, %s96
      %s98 = sphi 0, %s96
      %s99 = sphi 0, %s98
      %s113 = sphi 0, %s99
      %s117 = sphi 0, %s117
      %s119 = sphi 0, %s117
      %s120 = sphi 0, %s119
      %s134 = sphi 0, %s120
      %s138 = sphi 0, %s138
      %s140 = sphi 0, %s138
      %s141 = sphi 0, %s140
      %s155 = sphi 0, %s141
      %s159 = sphi 0, %s159
      %s161 = sphi 0, %s159
      %s162 = sphi 0, %s161
      %s176 = sphi 0, %s162
      %s180 = sphi 0, %s180
      %s182 = sphi 0, %s180
      %s183 = sphi 0, %s182
      %s197 = sphi 0, %s183
      %s201 = sphi 0, %s201
      %s203 = sphi 0, %s201
      %s204 = sphi 0, %s203
      %s218 = sphi 0, %s204
      %s222 = sphi 0, %s222
      %s224 = sphi 0, %s222
      %s225 = sphi 0, %s224
      %s239 = sphi 0, %s225
      %s243 = sphi 0, %s243
      %s245 = sphi 0, %s243
      %s246 = sphi 0, %s245
      %s260 = sphi 0, %s246
      %s266 = sphi 0, %s268
      %s269 = sphi 0, %s266
      %s270 = sphi 0, %s269
      %s286 = sphi 0, %s270
    $region4: #{time_conv_forward.1} parent=1 // loop_header_branch
      %23 = sbr.rel (%p21) target = $region8
    $region5: #{time_conv_forward.1} parent=1 // loop_body
      %s25 = ssub.s32 %s20, 1
      %s26 = ssub.s32 %s20, 2
      %s27 = sadd.s32 %s20, 1
      %s28 = ssub.s32 %s20, %s27
      %p29 = scmp.eq.s32.totalorder %s28, 0
      %s31 = sadd.s32 %s30, 1
      %s32 = scalar_select %p29, %s30, %s31
      %p35 = pneg %p29
      %p36 = scmp.eq.s32.totalorder %s20, 1
      %p37 = por %p35, %p36
      %p38 = scmp.ne.s32.totalorder %s30, %s33
      %p39 = scmp.eq.s32.totalorder %s20, 0
      %p40 = por %p38, %p39
      %p41 = scmp.ne.s32.totalorder %s30, %s33
      %p42 = scmp.eq.s32.totalorder %s25, 1
      %p43 = por %p41, %p42
      %p44 = scmp.ne.s32.totalorder %s33, %s34
      %p45 = scmp.eq.s32.totalorder %s25, 0
      %p46 = por %p44, %p45
      %p47 = scmp.ne.s32.totalorder %s33, %s34
      %p48 = scmp.eq.s32.totalorder %s26, 1
      %p49 = por %p47, %p48
      %p51 = scmp.ne.s32.totalorder %s34, %s50
      %p52 = scmp.eq.s32.totalorder %s26, 0
      %p53 = por %p51, %p52
      %s55 = sadd.s32 %s54, 1
      %p58 = scmp.eq.s32.totalorder %s20, 1
      %p59 = scmp.ne.s32.totalorder %s54, %s56
      %p60 = scmp.eq.s32.totalorder %s20, 0
      %p61 = por %p59, %p60
      %p62 = scmp.ne.s32.totalorder %s54, %s56
      %p63 = scmp.eq.s32.totalorder %s25, 1
      %p64 = por %p62, %p63
      %p65 = scmp.ne.s32.totalorder %s56, %s57
      %p66 = scmp.eq.s32.totalorder %s25, 0
      %p67 = por %p65, %p66
      %p68 = scmp.ne.s32.totalorder %s56, %s57
      %p69 = scmp.eq.s32.totalorder %s26, 1
      %p70 = por %p68, %p69
      %p72 = scmp.ne.s32.totalorder %s57, %s71
      %p73 = scmp.eq.s32.totalorder %s26, 0
      %p74 = por %p72, %p73
      %s76 = sadd.s32 %s75, 1
      %p79 = scmp.eq.s32.totalorder %s20, 1
      %p80 = scmp.ne.s32.totalorder %s75, %s77
      %p81 = scmp.eq.s32.totalorder %s20, 0
      %p82 = por %p80, %p81
      %p83 = scmp.ne.s32.totalorder %s75, %s77
      %p84 = scmp.eq.s32.totalorder %s25, 1
      %p85 = por %p83, %p84
      %p86 = scmp.ne.s32.totalorder %s77, %s78
      %p87 = scmp.eq.s32.totalorder %s25, 0
      %p88 = por %p86, %p87
      %p89 = scmp.ne.s32.totalorder %s77, %s78
      %p90 = scmp.eq.s32.totalorder %s26, 1
      %p91 = por %p89, %p90
      %p93 = scmp.ne.s32.totalorder %s78, %s92
      %p94 = scmp.eq.s32.totalorder %s26, 0
      %p95 = por %p93, %p94
      %s97 = sadd.s32 %s96, 1
      %p100 = scmp.eq.s32.totalorder %s20, 1
      %p101 = scmp.ne.s32.totalorder %s96, %s98
      %p102 = scmp.eq.s32.totalorder %s20, 0
      %p103 = por %p101, %p102
      %p104 = scmp.ne.s32.totalorder %s96, %s98
      %p105 = scmp.eq.s32.totalorder %s25, 1
      %p106 = por %p104, %p105
      %p107 = scmp.ne.s32.totalorder %s98, %s99
      %p108 = scmp.eq.s32.totalorder %s25, 0
      %p109 = por %p107, %p108
      %p110 = scmp.ne.s32.totalorder %s98, %s99
      %p111 = scmp.eq.s32.totalorder %s26, 1
      %p112 = por %p110, %p111
      %p114 = scmp.ne.s32.totalorder %s99, %s113
      %p115 = scmp.eq.s32.totalorder %s26, 0
      %p116 = por %p114, %p115
      %s118 = sadd.s32 %s117, 1
      %p121 = scmp.eq.s32.totalorder %s20, 1
      %p122 = scmp.ne.s32.totalorder %s117, %s119
      %p123 = scmp.eq.s32.totalorder %s20, 0
      %p124 = por %p122, %p123
      %p125 = scmp.ne.s32.totalorder %s117, %s119
      %p126 = scmp.eq.s32.totalorder %s25, 1
      %p127 = por %p125, %p126
      %p128 = scmp.ne.s32.totalorder %s119, %s120
      %p129 = scmp.eq.s32.totalorder %s25, 0
      %p130 = por %p128, %p129
      %p131 = scmp.ne.s32.totalorder %s119, %s120
      %p132 = scmp.eq.s32.totalorder %s26, 1
      %p133 = por %p131, %p132
      %p135 = scmp.ne.s32.totalorder %s120, %s134
      %p136 = scmp.eq.s32.totalorder %s26, 0
      %p137 = por %p135, %p136
      %s139 = sadd.s32 %s138, 1
      %p142 = scmp.eq.s32.totalorder %s20, 1
      %p143 = scmp.ne.s32.totalorder %s138, %s140
      %p144 = scmp.eq.s32.totalorder %s20, 0
      %p145 = por %p143, %p144
      %p146 = scmp.ne.s32.totalorder %s138, %s140
      %p147 = scmp.eq.s32.totalorder %s25, 1
      %p148 = por %p146, %p147
      %p149 = scmp.ne.s32.totalorder %s140, %s141
      %p150 = scmp.eq.s32.totalorder %s25, 0
      %p151 = por %p149, %p150
      %p152 = scmp.ne.s32.totalorder %s140, %s141
      %p153 = scmp.eq.s32.totalorder %s26, 1
      %p154 = por %p152, %p153
      %p156 = scmp.ne.s32.totalorder %s141, %s155
      %p157 = scmp.eq.s32.totalorder %s26, 0
      %p158 = por %p156, %p157
      %s160 = sadd.s32 %s159, 1
      %p163 = scmp.eq.s32.totalorder %s20, 1
      %p164 = scmp.ne.s32.totalorder %s159, %s161
      %p165 = scmp.eq.s32.totalorder %s20, 0
      %p166 = por %p164, %p165
      %p167 = scmp.ne.s32.totalorder %s159, %s161
      %p168 = scmp.eq.s32.totalorder %s25, 1
      %p169 = por %p167, %p168
      %p170 = scmp.ne.s32.totalorder %s161, %s162
      %p171 = scmp.eq.s32.totalorder %s25, 0
      %p172 = por %p170, %p171
      %p173 = scmp.ne.s32.totalorder %s161, %s162
      %p174 = scmp.eq.s32.totalorder %s26, 1
      %p175 = por %p173, %p174
      %p177 = scmp.ne.s32.totalorder %s162, %s176
      %p178 = scmp.eq.s32.totalorder %s26, 0
      %p179 = por %p177, %p178
      %s181 = sadd.s32 %s180, 1
      %p184 = scmp.eq.s32.totalorder %s20, 1
      %p185 = scmp.ne.s32.totalorder %s180, %s182
      %p186 = scmp.eq.s32.totalorder %s20, 0
      %p187 = por %p185, %p186
      %p188 = scmp.ne.s32.totalorder %s180, %s182
      %p189 = scmp.eq.s32.totalorder %s25, 1
      %p190 = por %p188, %p189
      %p191 = scmp.ne.s32.totalorder %s182, %s183
      %p192 = scmp.eq.s32.totalorder %s25, 0
      %p193 = por %p191, %p192
      %p194 = scmp.ne.s32.totalorder %s182, %s183
      %p195 = scmp.eq.s32.totalorder %s26, 1
      %p196 = por %p194, %p195
      %p198 = scmp.ne.s32.totalorder %s183, %s197
      %p199 = scmp.eq.s32.totalorder %s26, 0
      %p200 = por %p198, %p199
      %s202 = sadd.s32 %s201, 1
      %p205 = scmp.eq.s32.totalorder %s20, 1
      %p206 = scmp.ne.s32.totalorder %s201, %s203
      %p207 = scmp.eq.s32.totalorder %s20, 0
      %p208 = por %p206, %p207
      %p209 = scmp.ne.s32.totalorder %s201, %s203
      %p210 = scmp.eq.s32.totalorder %s25, 1
      %p211 = por %p209, %p210
      %p212 = scmp.ne.s32.totalorder %s203, %s204
      %p213 = scmp.eq.s32.totalorder %s25, 0
      %p214 = por %p212, %p213
      %p215 = scmp.ne.s32.totalorder %s203, %s204
      %p216 = scmp.eq.s32.totalorder %s26, 1
      %p217 = por %p215, %p216
      %p219 = scmp.ne.s32.totalorder %s204, %s218
      %p220 = scmp.eq.s32.totalorder %s26, 0
      %p221 = por %p219, %p220
      %s223 = sadd.s32 %s222, 1
      %p226 = scmp.eq.s32.totalorder %s20, 1
      %p227 = scmp.ne.s32.totalorder %s222, %s224
      %p228 = scmp.eq.s32.totalorder %s20, 0
      %p229 = por %p227, %p228
      %p230 = scmp.ne.s32.totalorder %s222, %s224
      %p231 = scmp.eq.s32.totalorder %s25, 1
      %p232 = por %p230, %p231
      %p233 = scmp.ne.s32.totalorder %s224, %s225
      %p234 = scmp.eq.s32.totalorder %s25, 0
      %p235 = por %p233, %p234
      %p236 = scmp.ne.s32.totalorder %s224, %s225
      %p237 = scmp.eq.s32.totalorder %s26, 1
      %p238 = por %p236, %p237
      %p240 = scmp.ne.s32.totalorder %s225, %s239
      %p241 = scmp.eq.s32.totalorder %s26, 0
      %p242 = por %p240, %p241
      %s244 = sadd.s32 %s243, 1
      %p247 = scmp.eq.s32.totalorder %s20, 1
      %p248 = scmp.ne.s32.totalorder %s243, %s245
      %p249 = scmp.eq.s32.totalorder %s20, 0
      %p250 = por %p248, %p249
      %p251 = scmp.ne.s32.totalorder %s243, %s245
      %p252 = scmp.eq.s32.totalorder %s25, 1
      %p253 = por %p251, %p252
      %p254 = scmp.ne.s32.totalorder %s245, %s246
      %p255 = scmp.eq.s32.totalorder %s25, 0
      %p256 = por %p254, %p255
      %p257 = scmp.ne.s32.totalorder %s245, %s246
      %p258 = scmp.eq.s32.totalorder %s26, 1
      %p259 = por %p257, %p258
      %p261 = scmp.ne.s32.totalorder %s246, %s260
      %p262 = scmp.eq.s32.totalorder %s26, 0
      %p263 = por %p261, %p262
      %s264 = ssub.s32 %s20, %s27
      %p265 = scmp.eq.s32.totalorder %s264, 0
      %s267 = sadd.s32 %s266, 1
      %s268 = scalar_select %p265, %s266, %s267
      %p271 = pneg %p265
      %p272 = scmp.eq.s32.totalorder %s20, 1
      %p273 = por %p271, %p272
      %p274 = scmp.ne.s32.totalorder %s266, %s269
      %p275 = scmp.eq.s32.totalorder %s20, 0
      %p276 = por %p274, %p275
      %p277 = scmp.ne.s32.totalorder %s266, %s269
      %p278 = scmp.eq.s32.totalorder %s25, 1
      %p279 = por %p277, %p278
      %p280 = scmp.ne.s32.totalorder %s269, %s270
      %p281 = scmp.eq.s32.totalorder %s25, 0
      %p282 = por %p280, %p281
      %p283 = scmp.ne.s32.totalorder %s269, %s270
      %p284 = scmp.eq.s32.totalorder %s26, 1
      %p285 = por %p283, %p284
      %p287 = scmp.ne.s32.totalorder %s270, %s286
      %p288 = scmp.eq.s32.totalorder %s26, 0
      %p289 = por %p287, %p288
      %p290 = scmp.le.s32.totalorder 1, %s20
      %p291 = scmp.lt.s32.totalorder %s20, 3
      %p292 = pnand %p290, %p291
      %p293 = pneg %p292
      // Predicated region
      $region9: #{time_conv_forward.1} parent=5 // pred_check
        _
      $region10: #{time_conv_forward.1} parent=5 // pred_check_branch
        %295 = sbr.rel (%p292) target = $region12
      $region11: #{time_conv_forward.1} parent=5 // pred_region
        %s296 = ssub.s32 %s20, 1
        // Predicated region
        $region13: #{time_conv_forward.1} parent=11 // pred_check
          %p297 = pneg %p67
        $region14: #{time_conv_forward.1} parent=11 // pred_check_branch
          %299 = sbr.rel (%p297) target = $region16
        $region15: #{time_conv_forward.1} parent=11 // pred_region
          _
        $region16: #{time_conv_forward.1} parent=11 // pred_fallthru
          _
        // Predicated region
        $region17: #{time_conv_forward.1} parent=11 // pred_check
          %p300 = pneg %p88
        $region18: #{time_conv_forward.1} parent=11 // pred_check_branch
          %302 = sbr.rel (%p300) target = $region20
        $region19: #{time_conv_forward.1} parent=11 // pred_region
          _
        $region20: #{time_conv_forward.1} parent=11 // pred_fallthru
          _
        // Predicated region
        $region21: #{time_conv_forward.1} parent=11 // pred_check
          %p303 = pneg %p109
        $region22: #{time_conv_forward.1} parent=11 // pred_check_branch
          %305 = sbr.rel (%p303) target = $region24
        $region23: #{time_conv_forward.1} parent=11 // pred_region
          _
        $region24: #{time_conv_forward.1} parent=11 // pred_fallthru
          _
        // Predicated region
        $region25: #{time_conv_forward.1} parent=11 // pred_check
          %p306 = pneg %p130
        $region26: #{time_conv_forward.1} parent=11 // pred_check_branch
          %308 = sbr.rel (%p306) target = $region28
        $region27: #{time_conv_forward.1} parent=11 // pred_region
          _
        $region28: #{time_conv_forward.1} parent=11 // pred_fallthru
          _
        // Predicated region
        $region29: #{time_conv_forward.1} parent=11 // pred_check
          %p309 = pneg %p151
        $region30: #{time_conv_forward.1} parent=11 // pred_check_branch
          %311 = sbr.rel (%p309) target = $region32
        $region31: #{time_conv_forward.1} parent=11 // pred_region
          _
        $region32: #{time_conv_forward.1} parent=11 // pred_fallthru
          _
        // Predicated region
        $region33: #{time_conv_forward.1} parent=11 // pred_check
          %p312 = pneg %p172
        $region34: #{time_conv_forward.1} parent=11 // pred_check_branch
          %314 = sbr.rel (%p312) target = $region36
        $region35: #{time_conv_forward.1} parent=11 // pred_region
          _
        $region36: #{time_conv_forward.1} parent=11 // pred_fallthru
          _
        // Predicated region
        $region37: #{time_conv_forward.1} parent=11 // pred_check
          %p315 = pneg %p193
        $region38: #{time_conv_forward.1} parent=11 // pred_check_branch
          %317 = sbr.rel (%p315) target = $region40
        $region39: #{time_conv_forward.1} parent=11 // pred_region
          _
        $region40: #{time_conv_forward.1} parent=11 // pred_fallthru
          _
        // Predicated region
        $region41: #{time_conv_forward.1} parent=11 // pred_check
          %p318 = pneg %p214
        $region42: #{time_conv_forward.1} parent=11 // pred_check_branch
          %320 = sbr.rel (%p318) target = $region44
        $region43: #{time_conv_forward.1} parent=11 // pred_region
          _
        $region44: #{time_conv_forward.1} parent=11 // pred_fallthru
          _
        // Predicated region
        $region45: #{time_conv_forward.1} parent=11 // pred_check
          %p321 = pneg %p235
        $region46: #{time_conv_forward.1} parent=11 // pred_check_branch
          %323 = sbr.rel (%p321) target = $region48
        $region47: #{time_conv_forward.1} parent=11 // pred_region
          _
        $region48: #{time_conv_forward.1} parent=11 // pred_fallthru
          _
        // Predicated region
        $region49: #{time_conv_forward.1} parent=11 // pred_check
          %p324 = pneg %p256
        $region50: #{time_conv_forward.1} parent=11 // pred_check_branch
          %326 = sbr.rel (%p324) target = $region52
        $region51: #{time_conv_forward.1} parent=11 // pred_region
          _
        $region52: #{time_conv_forward.1} parent=11 // pred_fallthru
          _
      $region12: #{time_conv_forward.1} parent=5 // pred_fallthru
        _
      %p327 = scmp.lt.s32.totalorder %s20, 2
      // Predicated region
      $region53: #{time_conv_forward.1} parent=5 // pred_check
        %p328 = pneg %p327
      $region54: #{time_conv_forward.1} parent=5 // pred_check_branch
        %330 = sbr.rel (%p328) target = $region56
      $region55: #{time_conv_forward.1} parent=5 // pred_region
        // Predicated region
        $region57: #{time_conv_forward.1} parent=55 // pred_check
          %p331 = pneg %p40
        $region58: #{time_conv_forward.1} parent=55 // pred_check_branch
          %333 = sbr.rel (%p331) target = $region60
        $region59: #{time_conv_forward.1} parent=55 // pred_region
          %p334 = scmp.lt.s32.totalorder %s20, 1
          %s335 = scalar_select %p334, %s20, 1
          %s336 = smul.addr %s335, 4
          %s337 = smul.addr %s336, 8
          %s338 = scalar_lea.vmem %s0, %s337
        $region60: #{time_conv_forward.1} parent=55 // pred_fallthru
          _
      $region56: #{time_conv_forward.1} parent=5 // pred_fallthru
        _
      %p339 = scmp.le.s32.totalorder 1, %s20
      %p340 = scmp.lt.s32.totalorder %s20, 3
      %p341 = pnand %p339, %p340
      %p342 = pneg %p341
      // Predicated region
      $region61: #{time_conv_forward.1} parent=5 // pred_check
        _
      $region62: #{time_conv_forward.1} parent=5 // pred_check_branch
        %344 = sbr.rel (%p341) target = $region64
      $region63: #{time_conv_forward.1} parent=5 // pred_region
        %s345 = ssub.s32 %s20, 1
        %p346 = scmp.lt.s32.totalorder %s25, 1
        %s347 = scalar_select %p346, %s25, 1
        %s348 = smul.addr %s347, 4
        %s349 = smul.addr %s348, 8
        %s350 = scalar_lea.vmem %s0, %s349
        %p351 = pneg %p46
        %p352 = pneg %p43
        %p353 = pneg %p67
        %p354 = pneg %p64
        %p355 = pneg %p88
        %p356 = pneg %p85
        %p357 = pneg %p109
        %p358 = pneg %p106
        %p359 = pneg %p130
        %p360 = pneg %p127
        %p361 = pneg %p151
        %p362 = pneg %p148
        %p363 = pneg %p172
        %p364 = pneg %p169
        %p365 = pneg %p193
        %p366 = pneg %p190
        %p367 = pneg %p214
        %p368 = pneg %p211
        %p369 = pneg %p235
        %p370 = pneg %p232
        %p371 = pneg %p256
        %p372 = pneg %p253
        %p373 = pneg %p282
        %p374 = pneg %p279
        %s375 = sand.u32 %s269, 1
        %s376 = scalar_lea.sflag [#allocation3], %s375
        %s377 = sand.u32 %s269, 1
        %s378 = scalar_lea.vmem [#allocation2], %s377
        %p379 = scmp.lt.s32.totalorder %s25, 1
        %s380 = scalar_select %p379, %s25, 1
        %s381 = smul.addr %s380, 4
        %s382 = smul.addr %s381, 8
        %s383 = scalar_lea.vmem %s0, %s382
        %v384 = vlaneseq
        %v385 = vshrl.u32 %v384, 7
        %v386 = vadd.s32 %v385, 8
        %v387 = vadd.s32 %v385, 16
        %v388 = vadd.s32 %v385, 24
        %v389 = vlaneseq
        %v390 = vand.u32 %v389, 127
        %v391 = vadd.s32 %v390, 1
        %vm392 = vcmp.eq.s32.totalorder %v385, %v391
        %vm393 = vcmp.eq.s32.totalorder %v386, %v391
        %vm394 = vcmp.eq.s32.totalorder %v387, %v391
        %vm395 = vcmp.eq.s32.totalorder %v388, %v391
        %v396 = vsel %vm392, 1, 0
        %v397 = vsel %vm393, 1, 0
        %v398 = vsel %vm394, 1, 0
        %v399 = vsel %vm395, 1, 0
        %v400 = vcvt.s32.f32 %v396
        %v401 = vcvt.s32.f32 %v397
        %v402 = vcvt.s32.f32 %v398
        %v403 = vcvt.s32.f32 %v399
        %v404 = vadd.s32 %v385, 1
        %v405 = vadd.s32 %v386, 1
        %v406 = vadd.s32 %v387, 1
        %v407 = vadd.s32 %v388, 1
        %vm408 = vcmp.eq.s32.totalorder %v404, %v390
        %vm409 = vcmp.eq.s32.totalorder %v405, %v390
        %vm410 = vcmp.eq.s32.totalorder %v406, %v390
        %vm411 = vcmp.eq.s32.totalorder %v407, %v390
        %v412 = vsel %vm408, 1, 0
        %v413 = vsel %vm409, 1, 0
        %v414 = vsel %vm410, 1, 0
        %v415 = vsel %vm411, 1, 0
        %v416 = vcvt.s32.f32 %v412
        %v417 = vcvt.s32.f32 %v413
        %v418 = vcvt.s32.f32 %v414
        %v419 = vcvt.s32.f32 %v415
        %v420 = vld [vmem:[%s383] sm:$0xff]
        %v421 = vld [vmem:[%s383 + $0x8] sm:$0xff]
        %v422 = vld [vmem:[%s383 + $0x10] sm:$0xff]
        %v423 = vld [vmem:[%s383 + $0x18] sm:$0xff]
        %v424 = vld [vmem:[%s6] sm:$0x1]
        %vm425 = vcmask 261120
        %v427 = vsel %vm425, %v400, 0
        %v430 = vsel %vm425, %v401, 0
        %v433 = vsel %vm425, %v402, 0
        %v436 = vsel %vm425, %v403, 0
        %438 = vmatpush.msra.mxu0 0.0
        %439 = vmatpush.msra.mxu0 0.0
        %440 = vmatpush.msra.mxu0 0.0
        %441 = vmatpush.msra.mxu0 0.0
        %442 = vmatpush.msra.mxu0 0.0
        %443 = vmatpush.msra.mxu0 0.0
        %444 = vmatpush.msra.mxu0 0.0
        %445 = vmatpush.msra.mxu0 0.0
        %446 = vmatpush.msra.mxu0 0.0
        %447 = vmatpush.msra.mxu0 0.0
        %448 = vmatpush.msra.mxu0 0.0
        %449 = vmatpush.msra.mxu0 0.0
        %450 = vmatpush.msra.mxu0 %v423
        %451 = vmatpush.msra.mxu0 %v422
        %452 = vmatpush.msra.mxu0 %v421
        %453 = vmatpush.msra.mxu0 %v420
        %454 = vmatmul.f32.gmra.mxu0 %v427
        %v455 = vpop.f32.mrf.mxu0
        %v456 = vadd.f32 0.0, %v455
        %457 = vmatmul.f32.gmra.mxu0 %v430
        %v458 = vpop.f32.mrf.mxu0
        %v459 = vadd.f32 0.0, %v458
        %460 = vmatmul.f32.gmra.mxu0 %v433
        %v461 = vpop.f32.mrf.mxu0
        %v462 = vadd.f32 0.0, %v461
        %463 = vmatmul.f32.gmra.mxu0 %v436
        %v464 = vpop.f32.mrf.mxu0
        %v465 = vadd.f32 0.0, %v464
        %466 = vdwg.mxu0
        %v468 = vsel %vm425, %v416, 0
        %v471 = vsel %vm425, %v417, 0
        %v474 = vsel %vm425, %v418, 0
        %v477 = vsel %vm425, %v419, 0
        %479 = vmatpush.msra.mxu0 0.0
        %480 = vmatpush.msra.mxu0 0.0
        %481 = vmatpush.msra.mxu0 0.0
        %482 = vmatpush.msra.mxu0 0.0
        %483 = vmatpush.msra.mxu0 0.0
        %484 = vmatpush.msra.mxu0 0.0
        %485 = vmatpush.msra.mxu0 0.0
        %486 = vmatpush.msra.mxu0 0.0
        %487 = vmatpush.msra.mxu0 0.0
        %488 = vmatpush.msra.mxu0 0.0
        %489 = vmatpush.msra.mxu0 0.0
        %490 = vmatpush.msra.mxu0 0.0
        %491 = vmatpush.msra.mxu0 %v423
        %492 = vmatpush.msra.mxu0 %v422
        %493 = vmatpush.msra.mxu0 %v421
        %494 = vmatpush.msra.mxu0 %v420
        %495 = vmatmul.f32.gmra.mxu0 %v468
        %v496 = vpop.f32.mrf.mxu0
        %v497 = vadd.f32 0.0, %v496
        %498 = vmatmul.f32.gmra.mxu0 %v471
        %v499 = vpop.f32.mrf.mxu0
        %v500 = vadd.f32 0.0, %v499
        %501 = vmatmul.f32.gmra.mxu0 %v474
        %v502 = vpop.f32.mrf.mxu0
        %v503 = vadd.f32 0.0, %v502
        %504 = vmatmul.f32.gmra.mxu0 %v477
        %v505 = vpop.f32.mrf.mxu0
        %v506 = vadd.f32 0.0, %v505
        %507 = vdwg.mxu0
        %v508 = vld [vmem:[%s1] sm:$0xff]
        %v509 = vld [vmem:[%s1 + $0x8] sm:$0xff]
        %v510 = vld [vmem:[%s1 + $0x10] sm:$0xff]
        %v511 = vld [vmem:[%s1 + $0x18] sm:$0xff]
        %v512 = vld [vmem:[%s1 + $0x20] sm:$0xff]
        %v513 = vld [vmem:[%s1 + $0x28] sm:$0xff]
        %v514 = vld [vmem:[%s1 + $0x30] sm:$0xff]
        %v515 = vld [vmem:[%s1 + $0x38] sm:$0xff]
        %v517 = vsel %vm425, %v456, 0
        %v520 = vsel %vm425, %v459, 0
        %v523 = vsel %vm425, %v462, 0
        %v526 = vsel %vm425, %v465, 0
        %528 = vmatpush.msra.mxu0 0.0
        %529 = vmatpush.msra.mxu0 0.0
        %530 = vmatpush.msra.mxu0 0.0
        %531 = vmatpush.msra.mxu0 0.0
        %532 = vmatpush.msra.mxu0 0.0
        %533 = vmatpush.msra.mxu0 0.0
        %534 = vmatpush.msra.mxu0 0.0
        %535 = vmatpush.msra.mxu0 0.0
        %536 = vmatpush.msra.mxu0 0.0
        %537 = vmatpush.msra.mxu0 0.0
        %538 = vmatpush.msra.mxu0 0.0
        %539 = vmatpush.msra.mxu0 0.0
        %540 = vmatpush.msra.mxu0 %v515
        %541 = vmatpush.msra.mxu0 %v514
        %542 = vmatpush.msra.mxu0 %v513
        %543 = vmatpush.msra.mxu0 %v512
        %544 = vmatmul.f32.gmra.mxu0 %v517
        %v545 = vpop.f32.mrf.mxu0
        %v546 = vadd.f32 0.0, %v545
        %547 = vmatmul.f32.gmra.mxu0 %v520
        %v548 = vpop.f32.mrf.mxu0
        %v549 = vadd.f32 0.0, %v548
        %550 = vmatmul.f32.gmra.mxu0 %v523
        %v551 = vpop.f32.mrf.mxu0
        %v552 = vadd.f32 0.0, %v551
        %553 = vmatmul.f32.gmra.mxu0 %v526
        %v554 = vpop.f32.mrf.mxu0
        %v555 = vadd.f32 0.0, %v554
        %556 = vdwg.mxu0
        %v558 = vsel %vm425, %v420, 0
        %v561 = vsel %vm425, %v421, 0
        %v564 = vsel %vm425, %v422, 0
        %v567 = vsel %vm425, %v423, 0
        %569 = vmatpush.msra.mxu0 0.0
        %570 = vmatpush.msra.mxu0 0.0
        %571 = vmatpush.msra.mxu0 0.0
        %572 = vmatpush.msra.mxu0 0.0
        %573 = vmatpush.msra.mxu0 0.0
        %574 = vmatpush.msra.mxu0 0.0
        %575 = vmatpush.msra.mxu0 0.0
        %576 = vmatpush.msra.mxu0 0.0
        %577 = vmatpush.msra.mxu0 0.0
        %578 = vmatpush.msra.mxu0 0.0
        %579 = vmatpush.msra.mxu0 0.0
        %580 = vmatpush.msra.mxu0 0.0
        %581 = vmatpush.msra.mxu0 %v511
        %582 = vmatpush.msra.mxu0 %v510
        %583 = vmatpush.msra.mxu0 %v509
        %584 = vmatpush.msra.mxu0 %v508
        %585 = vmatmul.f32.gmra.mxu0 %v558
        %v586 = vpop.f32.mrf.mxu0
        %v587 = vadd.f32 %v546, %v586
        %588 = vmatmul.f32.gmra.mxu0 %v561
        %v589 = vpop.f32.mrf.mxu0
        %v590 = vadd.f32 %v549, %v589
        %591 = vmatmul.f32.gmra.mxu0 %v564
        %v592 = vpop.f32.mrf.mxu0
        %v593 = vadd.f32 %v552, %v592
        %594 = vmatmul.f32.gmra.mxu0 %v567
        %v595 = vpop.f32.mrf.mxu0
        %v596 = vadd.f32 %v555, %v595
        %597 = vdwg.mxu0
        %v598 = vld [vmem:[%s1 + $0x40] sm:$0xff]
        %v599 = vld [vmem:[%s1 + $0x48] sm:$0xff]
        %v600 = vld [vmem:[%s1 + $0x50] sm:$0xff]
        %v601 = vld [vmem:[%s1 + $0x58] sm:$0xff]
        %v603 = vsel %vm425, %v497, 0
        %v606 = vsel %vm425, %v500, 0
        %v609 = vsel %vm425, %v503, 0
        %v612 = vsel %vm425, %v506, 0
        %614 = vmatpush.msra.mxu0 0.0
        %615 = vmatpush.msra.mxu0 0.0
        %616 = vmatpush.msra.mxu0 0.0
        %617 = vmatpush.msra.mxu0 0.0
        %618 = vmatpush.msra.mxu0 0.0
        %619 = vmatpush.msra.mxu0 0.0
        %620 = vmatpush.msra.mxu0 0.0
        %621 = vmatpush.msra.mxu0 0.0
        %622 = vmatpush.msra.mxu0 0.0
        %623 = vmatpush.msra.mxu0 0.0
        %624 = vmatpush.msra.mxu0 0.0
        %625 = vmatpush.msra.mxu0 0.0
        %626 = vmatpush.msra.mxu0 %v601
        %627 = vmatpush.msra.mxu0 %v600
        %628 = vmatpush.msra.mxu0 %v599
        %629 = vmatpush.msra.mxu0 %v598
        %630 = vmatmul.f32.gmra.mxu0 %v603
        %v631 = vpop.f32.mrf.mxu0
        %v632 = vadd.f32 0.0, %v631
        %633 = vmatmul.f32.gmra.mxu0 %v606
        %v634 = vpop.f32.mrf.mxu0
        %v635 = vadd.f32 0.0, %v634
        %636 = vmatmul.f32.gmra.mxu0 %v609
        %v637 = vpop.f32.mrf.mxu0
        %v638 = vadd.f32 0.0, %v637
        %639 = vmatmul.f32.gmra.mxu0 %v612
        %v640 = vpop.f32.mrf.mxu0
        %v641 = vadd.f32 0.0, %v640
        %642 = vdwg.mxu0
        %v643 = vadd.f32 %v587, %v632
        %v644 = vadd.f32 %v590, %v635
        %v645 = vadd.f32 %v593, %v638
        %v646 = vadd.f32 %v596, %v641
        %v647 = vperm.slane %v424, 0
        %v648 = vadd.f32 %v643, %v647
        %v649 = vadd.f32 %v644, %v647
        %v650 = vadd.f32 %v645, %v647
        %v651 = vadd.f32 %v646, %v647
        %v652 = vmax.f32 %v648, 0.0
        %v653 = vmax.f32 %v649, 0.0
        %v654 = vmax.f32 %v650, 0.0
        %v655 = vmax.f32 %v651, 0.0
        %v656 = vld [vmem:[%s6 + $0x1] sm:$0x1]
        %657 = vmatpush.msra.mxu0 0.0
        %658 = vmatpush.msra.mxu0 0.0
        %659 = vmatpush.msra.mxu0 0.0
        %660 = vmatpush.msra.mxu0 0.0
        %661 = vmatpush.msra.mxu0 0.0
        %662 = vmatpush.msra.mxu0 0.0
        %663 = vmatpush.msra.mxu0 0.0
        %664 = vmatpush.msra.mxu0 0.0
        %665 = vmatpush.msra.mxu0 0.0
        %666 = vmatpush.msra.mxu0 0.0
        %667 = vmatpush.msra.mxu0 0.0
        %668 = vmatpush.msra.mxu0 0.0
        %669 = vmatpush.msra.mxu0 %v655
        %670 = vmatpush.msra.mxu0 %v654
        %671 = vmatpush.msra.mxu0 %v653
        %672 = vmatpush.msra.mxu0 %v652
        %673 = vmatmul.f32.gmra.mxu0 %v427
        %v674 = vpop.f32.mrf.mxu0
        %v675 = vadd.f32 0.0, %v674
        %676 = vmatmul.f32.gmra.mxu0 %v430
        %v677 = vpop.f32.mrf.mxu0
        %v678 = vadd.f32 0.0, %v677
        %679 = vmatmul.f32.gmra.mxu0 %v433
        %v680 = vpop.f32.mrf.mxu0
        %v681 = vadd.f32 0.0, %v680
        %682 = vmatmul.f32.gmra.mxu0 %v436
        %v683 = vpop.f32.mrf.mxu0
        %v684 = vadd.f32 0.0, %v683
        %685 = vdwg.mxu0
        %686 = vmatpush.msra.mxu0 0.0
        %687 = vmatpush.msra.mxu0 0.0
        %688 = vmatpush.msra.mxu0 0.0
        %689 = vmatpush.msra.mxu0 0.0
        %690 = vmatpush.msra.mxu0 0.0
        %691 = vmatpush.msra.mxu0 0.0
        %692 = vmatpush.msra.mxu0 0.0
        %693 = vmatpush.msra.mxu0 0.0
        %694 = vmatpush.msra.mxu0 0.0
        %695 = vmatpush.msra.mxu0 0.0
        %696 = vmatpush.msra.mxu0 0.0
        %697 = vmatpush.msra.mxu0 0.0
        %698 = vmatpush.msra.mxu0 %v655
        %699 = vmatpush.msra.mxu0 %v654
        %700 = vmatpush.msra.mxu0 %v653
        %701 = vmatpush.msra.mxu0 %v652
        %702 = vmatmul.f32.gmra.mxu0 %v468
        %v703 = vpop.f32.mrf.mxu0
        %v704 = vadd.f32 0.0, %v703
        %705 = vmatmul.f32.gmra.mxu0 %v471
        %v706 = vpop.f32.mrf.mxu0
        %v707 = vadd.f32 0.0, %v706
        %708 = vmatmul.f32.gmra.mxu0 %v474
        %v709 = vpop.f32.mrf.mxu0
        %v710 = vadd.f32 0.0, %v709
        %711 = vmatmul.f32.gmra.mxu0 %v477
        %v712 = vpop.f32.mrf.mxu0
        %v713 = vadd.f32 0.0, %v712
        %714 = vdwg.mxu0
        %v715 = vld [vmem:[%s2] sm:$0xff]
        %v716 = vld [vmem:[%s2 + $0x8] sm:$0xff]
        %v717 = vld [vmem:[%s2 + $0x10] sm:$0xff]
        %v718 = vld [vmem:[%s2 + $0x18] sm:$0xff]
        %v719 = vld [vmem:[%s2 + $0x20] sm:$0xff]
        %v720 = vld [vmem:[%s2 + $0x28] sm:$0xff]
        %v721 = vld [vmem:[%s2 + $0x30] sm:$0xff]
        %v722 = vld [vmem:[%s2 + $0x38] sm:$0xff]
        %v723 = vld [vmem:[%s2 + $0x40] sm:$0xff]
        %v724 = vld [vmem:[%s2 + $0x48] sm:$0xff]
        %v725 = vld [vmem:[%s2 + $0x50] sm:$0xff]
        %v726 = vld [vmem:[%s2 + $0x58] sm:$0xff]
        %v727 = vld [vmem:[%s2 + $0x60] sm:$0xff]
        %v728 = vld [vmem:[%s2 + $0x68] sm:$0xff]
        %v729 = vld [vmem:[%s2 + $0x70] sm:$0xff]
        %v730 = vld [vmem:[%s2 + $0x78] sm:$0xff]
        %v731 = vld [vmem:[%s2 + $0x80] sm:$0xff]
        %v732 = vld [vmem:[%s2 + $0x88] sm:$0xff]
        %v733 = vld [vmem:[%s2 + $0x90] sm:$0xff]
        %v734 = vld [vmem:[%s2 + $0x98] sm:$0xff]
        %v735 = vld [vmem:[%s2 + $0xa0] sm:$0xff]
        %v736 = vld [vmem:[%s2 + $0xa8] sm:$0xff]
        %v737 = vld [vmem:[%s2 + $0xb0] sm:$0xff]
        %v738 = vld [vmem:[%s2 + $0xb8] sm:$0xff]
        %v739 = vld [vmem:[%s2 + $0xc0] sm:$0xff]
        %v740 = vld [vmem:[%s2 + $0xc8] sm:$0xff]
        %v741 = vld [vmem:[%s2 + $0xd0] sm:$0xff]
        %v742 = vld [vmem:[%s2 + $0xd8] sm:$0xff]
        %v743 = vld [vmem:[%s2 + $0xe0] sm:$0xff]
        %v744 = vld [vmem:[%s2 + $0xe8] sm:$0xff]
        %v745 = vld [vmem:[%s2 + $0xf0] sm:$0xff]
        %v746 = vld [vmem:[%s2 + $0xf8] sm:$0xff]
        %747 = vmatpush.msra.mxu0 %v746
        %748 = vmatpush.msra.mxu0 %v745
        %749 = vmatpush.msra.mxu0 %v744
        %750 = vmatpush.msra.mxu0 %v743
        %751 = vmatpush.msra.mxu0 %v742
        %752 = vmatpush.msra.mxu0 %v741
        %753 = vmatpush.msra.mxu0 %v740
        %754 = vmatpush.msra.mxu0 %v739
        %755 = vmatpush.msra.mxu0 %v738
        %756 = vmatpush.msra.mxu0 %v737
        %757 = vmatpush.msra.mxu0 %v736
        %758 = vmatpush.msra.mxu0 %v735
        %759 = vmatpush.msra.mxu0 %v734
        %760 = vmatpush.msra.mxu0 %v733
        %761 = vmatpush.msra.mxu0 %v732
        %762 = vmatpush.msra.mxu0 %v731
        %763 = vmatmul.f32.gmra.mxu0 %v675
        %v764 = vpop.f32.mrf.mxu0
        %v765 = vadd.f32 0.0, %v764
        %766 = vmatmul.f32.gmra.mxu0 %v678
        %v767 = vpop.f32.mrf.mxu0
        %v768 = vadd.f32 0.0, %v767
        %769 = vmatmul.f32.gmra.mxu0 %v681
        %v770 = vpop.f32.mrf.mxu0
        %v771 = vadd.f32 0.0, %v770
        %772 = vmatmul.f32.gmra.mxu0 %v684
        %v773 = vpop.f32.mrf.mxu0
        %v774 = vadd.f32 0.0, %v773
        %775 = vdwg.mxu0
        %776 = vmatpush.msra.mxu0 %v730
        %777 = vmatpush.msra.mxu0 %v729
        %778 = vmatpush.msra.mxu0 %v728
        %779 = vmatpush.msra.mxu0 %v727
        %780 = vmatpush.msra.mxu0 %v726
        %781 = vmatpush.msra.mxu0 %v725
        %782 = vmatpush.msra.mxu0 %v724
        %783 = vmatpush.msra.mxu0 %v723
        %784 = vmatpush.msra.mxu0 %v722
        %785 = vmatpush.msra.mxu0 %v721
        %786 = vmatpush.msra.mxu0 %v720
        %787 = vmatpush.msra.mxu0 %v719
        %788 = vmatpush.msra.mxu0 %v718
        %789 = vmatpush.msra.mxu0 %v717
        %790 = vmatpush.msra.mxu0 %v716
        %791 = vmatpush.msra.mxu0 %v715
        %792 = vmatmul.f32.gmra.mxu0 %v652
        %v793 = vpop.f32.mrf.mxu0
        %v794 = vadd.f32 %v765, %v793
        %795 = vmatmul.f32.gmra.mxu0 %v653
        %v796 = vpop.f32.mrf.mxu0
        %v797 = vadd.f32 %v768, %v796
        %798 = vmatmul.f32.gmra.mxu0 %v654
        %v799 = vpop.f32.mrf.mxu0
        %v800 = vadd.f32 %v771, %v799
        %801 = vmatmul.f32.gmra.mxu0 %v655
        %v802 = vpop.f32.mrf.mxu0
        %v803 = vadd.f32 %v774, %v802
        %804 = vdwg.mxu0
        %v805 = vld [vmem:[%s2 + $0x100] sm:$0xff]
        %v806 = vld [vmem:[%s2 + $0x108] sm:$0xff]
        %v807 = vld [vmem:[%s2 + $0x110] sm:$0xff]
        %v808 = vld [vmem:[%s2 + $0x118] sm:$0xff]
        %v809 = vld [vmem:[%s2 + $0x120] sm:$0xff]
        %v810 = vld [vmem:[%s2 + $0x128] sm:$0xff]
        %v811 = vld [vmem:[%s2 + $0x130] sm:$0xff]
        %v812 = vld [vmem:[%s2 + $0x138] sm:$0xff]
        %v813 = vld [vmem:[%s2 + $0x140] sm:$0xff]
        %v814 = vld [vmem:[%s2 + $0x148] sm:$0xff]
        %v815 = vld [vmem:[%s2 + $0x150] sm:$0xff]
        %v816 = vld [vmem:[%s2 + $0x158] sm:$0xff]
        %v817 = vld [vmem:[%s2 + $0x160] sm:$0xff]
        %v818 = vld [vmem:[%s2 + $0x168] sm:$0xff]
        %v819 = vld [vmem:[%s2 + $0x170] sm:$0xff]
        %v820 = vld [vmem:[%s2 + $0x178] sm:$0xff]
        %821 = vmatpush.msra.mxu0 %v820
        %822 = vmatpush.msra.mxu0 %v819
        %823 = vmatpush.msra.mxu0 %v818
        %824 = vmatpush.msra.mxu0 %v817
        %825 = vmatpush.msra.mxu0 %v816
        %826 = vmatpush.msra.mxu0 %v815
        %827 = vmatpush.msra.mxu0 %v814
        %828 = vmatpush.msra.mxu0 %v813
        %829 = vmatpush.msra.mxu0 %v812
        %830 = vmatpush.msra.mxu0 %v811
        %831 = vmatpush.msra.mxu0 %v810
        %832 = vmatpush.msra.mxu0 %v809
        %833 = vmatpush.msra.mxu0 %v808
        %834 = vmatpush.msra.mxu0 %v807
        %835 = vmatpush.msra.mxu0 %v806
        %836 = vmatpush.msra.mxu0 %v805
        %837 = vmatmul.f32.gmra.mxu0 %v704
        %v838 = vpop.f32.mrf.mxu0
        %v839 = vadd.f32 0.0, %v838
        %840 = vmatmul.f32.gmra.mxu0 %v707
        %v841 = vpop.f32.mrf.mxu0
        %v842 = vadd.f32 0.0, %v841
        %843 = vmatmul.f32.gmra.mxu0 %v710
        %v844 = vpop.f32.mrf.mxu0
        %v845 = vadd.f32 0.0, %v844
        %846 = vmatmul.f32.gmra.mxu0 %v713
        %v847 = vpop.f32.mrf.mxu0
        %v848 = vadd.f32 0.0, %v847
        %849 = vdwg.mxu0
        %v850 = vadd.f32 %v794, %v839
        %v851 = vadd.f32 %v797, %v842
        %v852 = vadd.f32 %v800, %v845
        %v853 = vadd.f32 %v803, %v848
        %v854 = vperm.slane %v656, 0
        %v855 = vadd.f32 %v850, %v854
        %v856 = vadd.f32 %v851, %v854
        %v857 = vadd.f32 %v852, %v854
        %v858 = vadd.f32 %v853, %v854
        %v859 = vmax.f32 %v855, 0.0
        %v860 = vmax.f32 %v856, 0.0
        %v861 = vmax.f32 %v857, 0.0
        %v862 = vmax.f32 %v858, 0.0
        %v863 = vld [vmem:[%s6 + $0x2] sm:$0x1]
        %864 = vmatpush.msra.mxu0 0.0
        %865 = vmatpush.msra.mxu0 0.0
        %866 = vmatpush.msra.mxu0 0.0
        %867 = vmatpush.msra.mxu0 0.0
        %868 = vmatpush.msra.mxu0 0.0
        %869 = vmatpush.msra.mxu0 0.0
        %870 = vmatpush.msra.mxu0 0.0
        %871 = vmatpush.msra.mxu0 0.0
        %872 = vmatpush.msra.mxu0 0.0
        %873 = vmatpush.msra.mxu0 0.0
        %874 = vmatpush.msra.mxu0 0.0
        %875 = vmatpush.msra.mxu0 0.0
        %876 = vmatpush.msra.mxu0 %v862
        %877 = vmatpush.msra.mxu0 %v861
        %878 = vmatpush.msra.mxu0 %v860
        %879 = vmatpush.msra.mxu0 %v859
        %880 = vmatmul.f32.gmra.mxu0 %v427
        %v881 = vpop.f32.mrf.mxu0
        %v882 = vadd.f32 0.0, %v881
        %883 = vmatmul.f32.gmra.mxu0 %v430
        %v884 = vpop.f32.mrf.mxu0
        %v885 = vadd.f32 0.0, %v884
        %886 = vmatmul.f32.gmra.mxu0 %v433
        %v887 = vpop.f32.mrf.mxu0
        %v888 = vadd.f32 0.0, %v887
        %889 = vmatmul.f32.gmra.mxu0 %v436
        %v890 = vpop.f32.mrf.mxu0
        %v891 = vadd.f32 0.0, %v890
        %892 = vdwg.mxu0
        %893 = vmatpush.msra.mxu0 0.0
        %894 = vmatpush.msra.mxu0 0.0
        %895 = vmatpush.msra.mxu0 0.0
        %896 = vmatpush.msra.mxu0 0.0
        %897 = vmatpush.msra.mxu0 0.0
        %898 = vmatpush.msra.mxu0 0.0
        %899 = vmatpush.msra.mxu0 0.0
        %900 = vmatpush.msra.mxu0 0.0
        %901 = vmatpush.msra.mxu0 0.0
        %902 = vmatpush.msra.mxu0 0.0
        %903 = vmatpush.msra.mxu0 0.0
        %904 = vmatpush.msra.mxu0 0.0
        %905 = vmatpush.msra.mxu0 %v862
        %906 = vmatpush.msra.mxu0 %v861
        %907 = vmatpush.msra.mxu0 %v860
        %908 = vmatpush.msra.mxu0 %v859
        %909 = vmatmul.f32.gmra.mxu0 %v468
        %v910 = vpop.f32.mrf.mxu0
        %v911 = vadd.f32 0.0, %v910
        %912 = vmatmul.f32.gmra.mxu0 %v471
        %v913 = vpop.f32.mrf.mxu0
        %v914 = vadd.f32 0.0, %v913
        %915 = vmatmul.f32.gmra.mxu0 %v474
        %v916 = vpop.f32.mrf.mxu0
        %v917 = vadd.f32 0.0, %v916
        %918 = vmatmul.f32.gmra.mxu0 %v477
        %v919 = vpop.f32.mrf.mxu0
        %v920 = vadd.f32 0.0, %v919
        %921 = vdwg.mxu0
        %v922 = vld [vmem:[%s3] sm:$0xff]
        %v923 = vld [vmem:[%s3 + $0x8] sm:$0xff]
        %v924 = vld [vmem:[%s3 + $0x10] sm:$0xff]
        %v925 = vld [vmem:[%s3 + $0x18] sm:$0xff]
        %v926 = vld [vmem:[%s3 + $0x20] sm:$0xff]
        %v927 = vld [vmem:[%s3 + $0x28] sm:$0xff]
        %v928 = vld [vmem:[%s3 + $0x30] sm:$0xff]
        %v929 = vld [vmem:[%s3 + $0x38] sm:$0xff]
        %v930 = vld [vmem:[%s3 + $0x40] sm:$0xff]
        %v931 = vld [vmem:[%s3 + $0x48] sm:$0xff]
        %v932 = vld [vmem:[%s3 + $0x50] sm:$0xff]
        %v933 = vld [vmem:[%s3 + $0x58] sm:$0xff]
        %v934 = vld [vmem:[%s3 + $0x60] sm:$0xff]
        %v935 = vld [vmem:[%s3 + $0x68] sm:$0xff]
        %v936 = vld [vmem:[%s3 + $0x70] sm:$0xff]
        %v937 = vld [vmem:[%s3 + $0x78] sm:$0xff]
        %v938 = vld [vmem:[%s3 + $0x80] sm:$0xff]
        %v939 = vld [vmem:[%s3 + $0x88] sm:$0xff]
        %v940 = vld [vmem:[%s3 + $0x90] sm:$0xff]
        %v941 = vld [vmem:[%s3 + $0x98] sm:$0xff]
        %v942 = vld [vmem:[%s3 + $0xa0] sm:$0xff]
        %v943 = vld [vmem:[%s3 + $0xa8] sm:$0xff]
        %v944 = vld [vmem:[%s3 + $0xb0] sm:$0xff]
        %v945 = vld [vmem:[%s3 + $0xb8] sm:$0xff]
        %v946 = vld [vmem:[%s3 + $0xc0] sm:$0xff]
        %v947 = vld [vmem:[%s3 + $0xc8] sm:$0xff]
        %v948 = vld [vmem:[%s3 + $0xd0] sm:$0xff]
        %v949 = vld [vmem:[%s3 + $0xd8] sm:$0xff]
        %v950 = vld [vmem:[%s3 + $0xe0] sm:$0xff]
        %v951 = vld [vmem:[%s3 + $0xe8] sm:$0xff]
        %v952 = vld [vmem:[%s3 + $0xf0] sm:$0xff]
        %v953 = vld [vmem:[%s3 + $0xf8] sm:$0xff]
        %954 = vmatpush.msra.mxu0 %v953
        %955 = vmatpush.msra.mxu0 %v952
        %956 = vmatpush.msra.mxu0 %v951
        %957 = vmatpush.msra.mxu0 %v950
        %958 = vmatpush.msra.mxu0 %v949
        %959 = vmatpush.msra.mxu0 %v948
        %960 = vmatpush.msra.mxu0 %v947
        %961 = vmatpush.msra.mxu0 %v946
        %962 = vmatpush.msra.mxu0 %v945
        %963 = vmatpush.msra.mxu0 %v944
        %964 = vmatpush.msra.mxu0 %v943
        %965 = vmatpush.msra.mxu0 %v942
        %966 = vmatpush.msra.mxu0 %v941
        %967 = vmatpush.msra.mxu0 %v940
        %968 = vmatpush.msra.mxu0 %v939
        %969 = vmatpush.msra.mxu0 %v938
        %970 = vmatmul.f32.gmra.mxu0 %v882
        %v971 = vpop.f32.mrf.mxu0
        %v972 = vadd.f32 0.0, %v971
        %973 = vmatmul.f32.gmra.mxu0 %v885
        %v974 = vpop.f32.mrf.mxu0
        %v975 = vadd.f32 0.0, %v974
        %976 = vmatmul.f32.gmra.mxu0 %v888
        %v977 = vpop.f32.mrf.mxu0
        %v978 = vadd.f32 0.0, %v977
        %979 = vmatmul.f32.gmra.mxu0 %v891
        %v980 = vpop.f32.mrf.mxu0
        %v981 = vadd.f32 0.0, %v980
        %982 = vdwg.mxu0
        %983 = vmatpush.msra.mxu0 %v937
        %984 = vmatpush.msra.mxu0 %v936
        %985 = vmatpush.msra.mxu0 %v935
        %986 = vmatpush.msra.mxu0 %v934
        %987 = vmatpush.msra.mxu0 %v933
        %988 = vmatpush.msra.mxu0 %v932
        %989 = vmatpush.msra.mxu0 %v931
        %990 = vmatpush.msra.mxu0 %v930
        %991 = vmatpush.msra.mxu0 %v929
        %992 = vmatpush.msra.mxu0 %v928
        %993 = vmatpush.msra.mxu0 %v927
        %994 = vmatpush.msra.mxu0 %v926
        %995 = vmatpush.msra.mxu0 %v925
        %996 = vmatpush.msra.mxu0 %v924
        %997 = vmatpush.msra.mxu0 %v923
        %998 = vmatpush.msra.mxu0 %v922
        %999 = vmatmul.f32.gmra.mxu0 %v859
        %v1000 = vpop.f32.mrf.mxu0
        %v1001 = vadd.f32 %v972, %v1000
        %1002 = vmatmul.f32.gmra.mxu0 %v860
        %v1003 = vpop.f32.mrf.mxu0
        %v1004 = vadd.f32 %v975, %v1003
        %1005 = vmatmul.f32.gmra.mxu0 %v861
        %v1006 = vpop.f32.mrf.mxu0
        %v1007 = vadd.f32 %v978, %v1006
        %1008 = vmatmul.f32.gmra.mxu0 %v862
        %v1009 = vpop.f32.mrf.mxu0
        %v1010 = vadd.f32 %v981, %v1009
        %1011 = vdwg.mxu0
        %v1012 = vld [vmem:[%s3 + $0x100] sm:$0xff]
        %v1013 = vld [vmem:[%s3 + $0x108] sm:$0xff]
        %v1014 = vld [vmem:[%s3 + $0x110] sm:$0xff]
        %v1015 = vld [vmem:[%s3 + $0x118] sm:$0xff]
        %v1016 = vld [vmem:[%s3 + $0x120] sm:$0xff]
        %v1017 = vld [vmem:[%s3 + $0x128] sm:$0xff]
        %v1018 = vld [vmem:[%s3 + $0x130] sm:$0xff]
        %v1019 = vld [vmem:[%s3 + $0x138] sm:$0xff]
        %v1020 = vld [vmem:[%s3 + $0x140] sm:$0xff]
        %v1021 = vld [vmem:[%s3 + $0x148] sm:$0xff]
        %v1022 = vld [vmem:[%s3 + $0x150] sm:$0xff]
        %v1023 = vld [vmem:[%s3 + $0x158] sm:$0xff]
        %v1024 = vld [vmem:[%s3 + $0x160] sm:$0xff]
        %v1025 = vld [vmem:[%s3 + $0x168] sm:$0xff]
        %v1026 = vld [vmem:[%s3 + $0x170] sm:$0xff]
        %v1027 = vld [vmem:[%s3 + $0x178] sm:$0xff]
        %1028 = vmatpush.msra.mxu0 %v1027
        %1029 = vmatpush.msra.mxu0 %v1026
        %1030 = vmatpush.msra.mxu0 %v1025
        %1031 = vmatpush.msra.mxu0 %v1024
        %1032 = vmatpush.msra.mxu0 %v1023
        %1033 = vmatpush.msra.mxu0 %v1022
        %1034 = vmatpush.msra.mxu0 %v1021
        %1035 = vmatpush.msra.mxu0 %v1020
        %1036 = vmatpush.msra.mxu0 %v1019
        %1037 = vmatpush.msra.mxu0 %v1018
        %1038 = vmatpush.msra.mxu0 %v1017
        %1039 = vmatpush.msra.mxu0 %v1016
        %1040 = vmatpush.msra.mxu0 %v1015
        %1041 = vmatpush.msra.mxu0 %v1014
        %1042 = vmatpush.msra.mxu0 %v1013
        %1043 = vmatpush.msra.mxu0 %v1012
        %1044 = vmatmul.f32.gmra.mxu0 %v911
        %v1045 = vpop.f32.mrf.mxu0
        %v1046 = vadd.f32 0.0, %v1045
        %1047 = vmatmul.f32.gmra.mxu0 %v914
        %v1048 = vpop.f32.mrf.mxu0
        %v1049 = vadd.f32 0.0, %v1048
        %1050 = vmatmul.f32.gmra.mxu0 %v917
        %v1051 = vpop.f32.mrf.mxu0
        %v1052 = vadd.f32 0.0, %v1051
        %1053 = vmatmul.f32.gmra.mxu0 %v920
        %v1054 = vpop.f32.mrf.mxu0
        %v1055 = vadd.f32 0.0, %v1054
        %1056 = vdwg.mxu0
        %v1057 = vadd.f32 %v1001, %v1046
        %v1058 = vadd.f32 %v1004, %v1049
        %v1059 = vadd.f32 %v1007, %v1052
        %v1060 = vadd.f32 %v1010, %v1055
        %v1061 = vperm.slane %v863, 0
        %v1062 = vadd.f32 %v1057, %v1061
        %v1063 = vadd.f32 %v1058, %v1061
        %v1064 = vadd.f32 %v1059, %v1061
        %v1065 = vadd.f32 %v1060, %v1061
        %v1066 = vmax.f32 %v1062, 0.0
        %v1067 = vmax.f32 %v1063, 0.0
        %v1068 = vmax.f32 %v1064, 0.0
        %v1069 = vmax.f32 %v1065, 0.0
        %v1070 = vld [vmem:[%s6 + $0x3] sm:$0x1]
        %1071 = vmatpush.msra.mxu0 0.0
        %1072 = vmatpush.msra.mxu0 0.0
        %1073 = vmatpush.msra.mxu0 0.0
        %1074 = vmatpush.msra.mxu0 0.0
        %1075 = vmatpush.msra.mxu0 0.0
        %1076 = vmatpush.msra.mxu0 0.0
        %1077 = vmatpush.msra.mxu0 0.0
        %1078 = vmatpush.msra.mxu0 0.0
        %1079 = vmatpush.msra.mxu0 0.0
        %1080 = vmatpush.msra.mxu0 0.0
        %1081 = vmatpush.msra.mxu0 0.0
        %1082 = vmatpush.msra.mxu0 0.0
        %1083 = vmatpush.msra.mxu0 %v1069
        %1084 = vmatpush.msra.mxu0 %v1068
        %1085 = vmatpush.msra.mxu0 %v1067
        %1086 = vmatpush.msra.mxu0 %v1066
        %1087 = vmatmul.f32.gmra.mxu0 %v427
        %v1088 = vpop.f32.mrf.mxu0
        %v1089 = vadd.f32 0.0, %v1088
        %1090 = vmatmul.f32.gmra.mxu0 %v430
        %v1091 = vpop.f32.mrf.mxu0
        %v1092 = vadd.f32 0.0, %v1091
        %1093 = vmatmul.f32.gmra.mxu0 %v433
        %v1094 = vpop.f32.mrf.mxu0
        %v1095 = vadd.f32 0.0, %v1094
        %1096 = vmatmul.f32.gmra.mxu0 %v436
        %v1097 = vpop.f32.mrf.mxu0
        %v1098 = vadd.f32 0.0, %v1097
        %1099 = vdwg.mxu0
        %1100 = vmatpush.msra.mxu0 0.0
        %1101 = vmatpush.msra.mxu0 0.0
        %1102 = vmatpush.msra.mxu0 0.0
        %1103 = vmatpush.msra.mxu0 0.0
        %1104 = vmatpush.msra.mxu0 0.0
        %1105 = vmatpush.msra.mxu0 0.0
        %1106 = vmatpush.msra.mxu0 0.0
        %1107 = vmatpush.msra.mxu0 0.0
        %1108 = vmatpush.msra.mxu0 0.0
        %1109 = vmatpush.msra.mxu0 0.0
        %1110 = vmatpush.msra.mxu0 0.0
        %1111 = vmatpush.msra.mxu0 0.0
        %1112 = vmatpush.msra.mxu0 %v1069
        %1113 = vmatpush.msra.mxu0 %v1068
        %1114 = vmatpush.msra.mxu0 %v1067
        %1115 = vmatpush.msra.mxu0 %v1066
        %1116 = vmatmul.f32.gmra.mxu0 %v468
        %v1117 = vpop.f32.mrf.mxu0
        %v1118 = vadd.f32 0.0, %v1117
        %1119 = vmatmul.f32.gmra.mxu0 %v471
        %v1120 = vpop.f32.mrf.mxu0
        %v1121 = vadd.f32 0.0, %v1120
        %1122 = vmatmul.f32.gmra.mxu0 %v474
        %v1123 = vpop.f32.mrf.mxu0
        %v1124 = vadd.f32 0.0, %v1123
        %1125 = vmatmul.f32.gmra.mxu0 %v477
        %v1126 = vpop.f32.mrf.mxu0
        %v1127 = vadd.f32 0.0, %v1126
        %1128 = vdwg.mxu0
        %v1129 = vld [vmem:[%s4] sm:$0xff]
        %v1130 = vld [vmem:[%s4 + $0x8] sm:$0xff]
        %v1131 = vld [vmem:[%s4 + $0x10] sm:$0xff]
        %v1132 = vld [vmem:[%s4 + $0x18] sm:$0xff]
        %v1133 = vld [vmem:[%s4 + $0x20] sm:$0xff]
        %v1134 = vld [vmem:[%s4 + $0x28] sm:$0xff]
        %v1135 = vld [vmem:[%s4 + $0x30] sm:$0xff]
        %v1136 = vld [vmem:[%s4 + $0x38] sm:$0xff]
        %v1137 = vld [vmem:[%s4 + $0x40] sm:$0xff]
        %v1138 = vld [vmem:[%s4 + $0x48] sm:$0xff]
        %v1139 = vld [vmem:[%s4 + $0x50] sm:$0xff]
        %v1140 = vld [vmem:[%s4 + $0x58] sm:$0xff]
        %v1141 = vld [vmem:[%s4 + $0x60] sm:$0xff]
        %v1142 = vld [vmem:[%s4 + $0x68] sm:$0xff]
        %v1143 = vld [vmem:[%s4 + $0x70] sm:$0xff]
        %v1144 = vld [vmem:[%s4 + $0x78] sm:$0xff]
        %v1145 = vld [vmem:[%s4 + $0x80] sm:$0xff]
        %v1146 = vld [vmem:[%s4 + $0x88] sm:$0xff]
        %v1147 = vld [vmem:[%s4 + $0x90] sm:$0xff]
        %v1148 = vld [vmem:[%s4 + $0x98] sm:$0xff]
        %v1149 = vld [vmem:[%s4 + $0xa0] sm:$0xff]
        %v1150 = vld [vmem:[%s4 + $0xa8] sm:$0xff]
        %v1151 = vld [vmem:[%s4 + $0xb0] sm:$0xff]
        %v1152 = vld [vmem:[%s4 + $0xb8] sm:$0xff]
        %v1153 = vld [vmem:[%s4 + $0xc0] sm:$0xff]
        %v1154 = vld [vmem:[%s4 + $0xc8] sm:$0xff]
        %v1155 = vld [vmem:[%s4 + $0xd0] sm:$0xff]
        %v1156 = vld [vmem:[%s4 + $0xd8] sm:$0xff]
        %v1157 = vld [vmem:[%s4 + $0xe0] sm:$0xff]
        %v1158 = vld [vmem:[%s4 + $0xe8] sm:$0xff]
        %v1159 = vld [vmem:[%s4 + $0xf0] sm:$0xff]
        %v1160 = vld [vmem:[%s4 + $0xf8] sm:$0xff]
        %1161 = vmatpush.msra.mxu0 %v1160
        %1162 = vmatpush.msra.mxu0 %v1159
        %1163 = vmatpush.msra.mxu0 %v1158
        %1164 = vmatpush.msra.mxu0 %v1157
        %1165 = vmatpush.msra.mxu0 %v1156
        %1166 = vmatpush.msra.mxu0 %v1155
        %1167 = vmatpush.msra.mxu0 %v1154
        %1168 = vmatpush.msra.mxu0 %v1153
        %1169 = vmatpush.msra.mxu0 %v1152
        %1170 = vmatpush.msra.mxu0 %v1151
        %1171 = vmatpush.msra.mxu0 %v1150
        %1172 = vmatpush.msra.mxu0 %v1149
        %1173 = vmatpush.msra.mxu0 %v1148
        %1174 = vmatpush.msra.mxu0 %v1147
        %1175 = vmatpush.msra.mxu0 %v1146
        %1176 = vmatpush.msra.mxu0 %v1145
        %1177 = vmatmul.f32.gmra.mxu0 %v1089
        %v1178 = vpop.f32.mrf.mxu0
        %v1179 = vadd.f32 0.0, %v1178
        %1180 = vmatmul.f32.gmra.mxu0 %v1092
        %v1181 = vpop.f32.mrf.mxu0
        %v1182 = vadd.f32 0.0, %v1181
        %1183 = vmatmul.f32.gmra.mxu0 %v1095
        %v1184 = vpop.f32.mrf.mxu0
        %v1185 = vadd.f32 0.0, %v1184
        %1186 = vmatmul.f32.gmra.mxu0 %v1098
        %v1187 = vpop.f32.mrf.mxu0
        %v1188 = vadd.f32 0.0, %v1187
        %1189 = vdwg.mxu0
        %1190 = vmatpush.msra.mxu0 %v1144
        %1191 = vmatpush.msra.mxu0 %v1143
        %1192 = vmatpush.msra.mxu0 %v1142
        %1193 = vmatpush.msra.mxu0 %v1141
        %1194 = vmatpush.msra.mxu0 %v1140
        %1195 = vmatpush.msra.mxu0 %v1139
        %1196 = vmatpush.msra.mxu0 %v1138
        %1197 = vmatpush.msra.mxu0 %v1137
        %1198 = vmatpush.msra.mxu0 %v1136
        %1199 = vmatpush.msra.mxu0 %v1135
        %1200 = vmatpush.msra.mxu0 %v1134
        %1201 = vmatpush.msra.mxu0 %v1133
        %1202 = vmatpush.msra.mxu0 %v1132
        %1203 = vmatpush.msra.mxu0 %v1131
        %1204 = vmatpush.msra.mxu0 %v1130
        %1205 = vmatpush.msra.mxu0 %v1129
        %1206 = vmatmul.f32.gmra.mxu0 %v1066
        %v1207 = vpop.f32.mrf.mxu0
        %v1208 = vadd.f32 %v1179, %v1207
        %1209 = vmatmul.f32.gmra.mxu0 %v1067
        %v1210 = vpop.f32.mrf.mxu0
        %v1211 = vadd.f32 %v1182, %v1210
        %1212 = vmatmul.f32.gmra.mxu0 %v1068
        %v1213 = vpop.f32.mrf.mxu0
        %v1214 = vadd.f32 %v1185, %v1213
        %1215 = vmatmul.f32.gmra.mxu0 %v1069
        %v1216 = vpop.f32.mrf.mxu0
        %v1217 = vadd.f32 %v1188, %v1216
        %1218 = vdwg.mxu0
        %v1219 = vld [vmem:[%s4 + $0x100] sm:$0xff]
        %v1220 = vld [vmem:[%s4 + $0x108] sm:$0xff]
        %v1221 = vld [vmem:[%s4 + $0x110] sm:$0xff]
        %v1222 = vld [vmem:[%s4 + $0x118] sm:$0xff]
        %v1223 = vld [vmem:[%s4 + $0x120] sm:$0xff]
        %v1224 = vld [vmem:[%s4 + $0x128] sm:$0xff]
        %v1225 = vld [vmem:[%s4 + $0x130] sm:$0xff]
        %v1226 = vld [vmem:[%s4 + $0x138] sm:$0xff]
        %v1227 = vld [vmem:[%s4 + $0x140] sm:$0xff]
        %v1228 = vld [vmem:[%s4 + $0x148] sm:$0xff]
        %v1229 = vld [vmem:[%s4 + $0x150] sm:$0xff]
        %v1230 = vld [vmem:[%s4 + $0x158] sm:$0xff]
        %v1231 = vld [vmem:[%s4 + $0x160] sm:$0xff]
        %v1232 = vld [vmem:[%s4 + $0x168] sm:$0xff]
        %v1233 = vld [vmem:[%s4 + $0x170] sm:$0xff]
        %v1234 = vld [vmem:[%s4 + $0x178] sm:$0xff]
        %1235 = vmatpush.msra.mxu0 %v1234
        %1236 = vmatpush.msra.mxu0 %v1233
        %1237 = vmatpush.msra.mxu0 %v1232
        %1238 = vmatpush.msra.mxu0 %v1231
        %1239 = vmatpush.msra.mxu0 %v1230
        %1240 = vmatpush.msra.mxu0 %v1229
        %1241 = vmatpush.msra.mxu0 %v1228
        %1242 = vmatpush.msra.mxu0 %v1227
        %1243 = vmatpush.msra.mxu0 %v1226
        %1244 = vmatpush.msra.mxu0 %v1225
        %1245 = vmatpush.msra.mxu0 %v1224
        %1246 = vmatpush.msra.mxu0 %v1223
        %1247 = vmatpush.msra.mxu0 %v1222
        %1248 = vmatpush.msra.mxu0 %v1221
        %1249 = vmatpush.msra.mxu0 %v1220
        %1250 = vmatpush.msra.mxu0 %v1219
        %1251 = vmatmul.f32.gmra.mxu0 %v1118
        %v1252 = vpop.f32.mrf.mxu0
        %v1253 = vadd.f32 0.0, %v1252
        %1254 = vmatmul.f32.gmra.mxu0 %v1121
        %v1255 = vpop.f32.mrf.mxu0
        %v1256 = vadd.f32 0.0, %v1255
        %1257 = vmatmul.f32.gmra.mxu0 %v1124
        %v1258 = vpop.f32.mrf.mxu0
        %v1259 = vadd.f32 0.0, %v1258
        %1260 = vmatmul.f32.gmra.mxu0 %v1127
        %v1261 = vpop.f32.mrf.mxu0
        %v1262 = vadd.f32 0.0, %v1261
        %1263 = vdwg.mxu0
        %v1264 = vadd.f32 %v1208, %v1253
        %v1265 = vadd.f32 %v1211, %v1256
        %v1266 = vadd.f32 %v1214, %v1259
        %v1267 = vadd.f32 %v1217, %v1262
        %v1268 = vperm.slane %v1070, 0
        %v1269 = vadd.f32 %v1264, %v1268
        %v1270 = vadd.f32 %v1265, %v1268
        %v1271 = vadd.f32 %v1266, %v1268
        %v1272 = vadd.f32 %v1267, %v1268
        %v1273 = vmax.f32 %v1269, 0.0
        %v1274 = vmax.f32 %v1270, 0.0
        %v1275 = vmax.f32 %v1271, 0.0
        %v1276 = vmax.f32 %v1272, 0.0
        %v1277 = vld [vmem:[%s6 + $0x4] sm:$0x1]
        %1278 = vmatpush.msra.mxu0 0.0
        %1279 = vmatpush.msra.mxu0 0.0
        %1280 = vmatpush.msra.mxu0 0.0
        %1281 = vmatpush.msra.mxu0 0.0
        %1282 = vmatpush.msra.mxu0 0.0
        %1283 = vmatpush.msra.mxu0 0.0
        %1284 = vmatpush.msra.mxu0 0.0
        %1285 = vmatpush.msra.mxu0 0.0
        %1286 = vmatpush.msra.mxu0 0.0
        %1287 = vmatpush.msra.mxu0 0.0
        %1288 = vmatpush.msra.mxu0 0.0
        %1289 = vmatpush.msra.mxu0 0.0
        %1290 = vmatpush.msra.mxu0 %v1276
        %1291 = vmatpush.msra.mxu0 %v1275
        %1292 = vmatpush.msra.mxu0 %v1274
        %1293 = vmatpush.msra.mxu0 %v1273
        %1294 = vmatmul.f32.gmra.mxu0 %v427
        %v1295 = vpop.f32.mrf.mxu0
        %v1296 = vadd.f32 0.0, %v1295
        %1297 = vmatmul.f32.gmra.mxu0 %v430
        %v1298 = vpop.f32.mrf.mxu0
        %v1299 = vadd.f32 0.0, %v1298
        %1300 = vmatmul.f32.gmra.mxu0 %v433
        %v1301 = vpop.f32.mrf.mxu0
        %v1302 = vadd.f32 0.0, %v1301
        %1303 = vmatmul.f32.gmra.mxu0 %v436
        %v1304 = vpop.f32.mrf.mxu0
        %v1305 = vadd.f32 0.0, %v1304
        %1306 = vdwg.mxu0
        %1307 = vmatpush.msra.mxu0 0.0
        %1308 = vmatpush.msra.mxu0 0.0
        %1309 = vmatpush.msra.mxu0 0.0
        %1310 = vmatpush.msra.mxu0 0.0
        %1311 = vmatpush.msra.mxu0 0.0
        %1312 = vmatpush.msra.mxu0 0.0
        %1313 = vmatpush.msra.mxu0 0.0
        %1314 = vmatpush.msra.mxu0 0.0
        %1315 = vmatpush.msra.mxu0 0.0
        %1316 = vmatpush.msra.mxu0 0.0
        %1317 = vmatpush.msra.mxu0 0.0
        %1318 = vmatpush.msra.mxu0 0.0
        %1319 = vmatpush.msra.mxu0 %v1276
        %1320 = vmatpush.msra.mxu0 %v1275
        %1321 = vmatpush.msra.mxu0 %v1274
        %1322 = vmatpush.msra.mxu0 %v1273
        %1323 = vmatmul.f32.gmra.mxu0 %v468
        %v1324 = vpop.f32.mrf.mxu0
        %v1325 = vadd.f32 0.0, %v1324
        %1326 = vmatmul.f32.gmra.mxu0 %v471
        %v1327 = vpop.f32.mrf.mxu0
        %v1328 = vadd.f32 0.0, %v1327
        %1329 = vmatmul.f32.gmra.mxu0 %v474
        %v1330 = vpop.f32.mrf.mxu0
        %v1331 = vadd.f32 0.0, %v1330
        %1332 = vmatmul.f32.gmra.mxu0 %v477
        %v1333 = vpop.f32.mrf.mxu0
        %v1334 = vadd.f32 0.0, %v1333
        %1335 = vdwg.mxu0
        %v1336 = vld [vmem:[%s5] sm:$0xff]
        %v1337 = vld [vmem:[%s5 + $0x8] sm:$0xff]
        %v1338 = vld [vmem:[%s5 + $0x10] sm:$0xff]
        %v1339 = vld [vmem:[%s5 + $0x18] sm:$0xff]
        %v1340 = vld [vmem:[%s5 + $0x20] sm:$0xff]
        %v1341 = vld [vmem:[%s5 + $0x28] sm:$0xff]
        %v1342 = vld [vmem:[%s5 + $0x30] sm:$0xff]
        %v1343 = vld [vmem:[%s5 + $0x38] sm:$0xff]
        %v1344 = vld [vmem:[%s5 + $0x40] sm:$0xff]
        %v1345 = vld [vmem:[%s5 + $0x48] sm:$0xff]
        %v1346 = vld [vmem:[%s5 + $0x50] sm:$0xff]
        %v1347 = vld [vmem:[%s5 + $0x58] sm:$0xff]
        %v1348 = vld [vmem:[%s5 + $0x60] sm:$0xff]
        %v1349 = vld [vmem:[%s5 + $0x68] sm:$0xff]
        %v1350 = vld [vmem:[%s5 + $0x70] sm:$0xff]
        %v1351 = vld [vmem:[%s5 + $0x78] sm:$0xff]
        %v1352 = vld [vmem:[%s5 + $0x80] sm:$0xff]
        %v1353 = vld [vmem:[%s5 + $0x88] sm:$0xff]
        %v1354 = vld [vmem:[%s5 + $0x90] sm:$0xff]
        %v1355 = vld [vmem:[%s5 + $0x98] sm:$0xff]
        %v1356 = vld [vmem:[%s5 + $0xa0] sm:$0xff]
        %v1357 = vld [vmem:[%s5 + $0xa8] sm:$0xff]
        %v1358 = vld [vmem:[%s5 + $0xb0] sm:$0xff]
        %v1359 = vld [vmem:[%s5 + $0xb8] sm:$0xff]
        %v1360 = vld [vmem:[%s5 + $0xc0] sm:$0xff]
        %v1361 = vld [vmem:[%s5 + $0xc8] sm:$0xff]
        %v1362 = vld [vmem:[%s5 + $0xd0] sm:$0xff]
        %v1363 = vld [vmem:[%s5 + $0xd8] sm:$0xff]
        %v1364 = vld [vmem:[%s5 + $0xe0] sm:$0xff]
        %v1365 = vld [vmem:[%s5 + $0xe8] sm:$0xff]
        %v1366 = vld [vmem:[%s5 + $0xf0] sm:$0xff]
        %v1367 = vld [vmem:[%s5 + $0xf8] sm:$0xff]
        %1368 = vmatpush.msra.mxu0 %v1367
        %1369 = vmatpush.msra.mxu0 %v1366
        %1370 = vmatpush.msra.mxu0 %v1365
        %1371 = vmatpush.msra.mxu0 %v1364
        %1372 = vmatpush.msra.mxu0 %v1363
        %1373 = vmatpush.msra.mxu0 %v1362
        %1374 = vmatpush.msra.mxu0 %v1361
        %1375 = vmatpush.msra.mxu0 %v1360
        %1376 = vmatpush.msra.mxu0 %v1359
        %1377 = vmatpush.msra.mxu0 %v1358
        %1378 = vmatpush.msra.mxu0 %v1357
        %1379 = vmatpush.msra.mxu0 %v1356
        %1380 = vmatpush.msra.mxu0 %v1355
        %1381 = vmatpush.msra.mxu0 %v1354
        %1382 = vmatpush.msra.mxu0 %v1353
        %1383 = vmatpush.msra.mxu0 %v1352
        %1384 = vmatmul.f32.gmra.mxu0 %v1296
        %v1385 = vpop.f32.mrf.mxu0
        %v1386 = vadd.f32 0.0, %v1385
        %1387 = vmatmul.f32.gmra.mxu0 %v1299
        %v1388 = vpop.f32.mrf.mxu0
        %v1389 = vadd.f32 0.0, %v1388
        %1390 = vmatmul.f32.gmra.mxu0 %v1302
        %v1391 = vpop.f32.mrf.mxu0
        %v1392 = vadd.f32 0.0, %v1391
        %1393 = vmatmul.f32.gmra.mxu0 %v1305
        %v1394 = vpop.f32.mrf.mxu0
        %v1395 = vadd.f32 0.0, %v1394
        %1396 = vdwg.mxu0
        %1397 = vmatpush.msra.mxu0 %v1351
        %1398 = vmatpush.msra.mxu0 %v1350
        %1399 = vmatpush.msra.mxu0 %v1349
        %1400 = vmatpush.msra.mxu0 %v1348
        %1401 = vmatpush.msra.mxu0 %v1347
        %1402 = vmatpush.msra.mxu0 %v1346
        %1403 = vmatpush.msra.mxu0 %v1345
        %1404 = vmatpush.msra.mxu0 %v1344
        %1405 = vmatpush.msra.mxu0 %v1343
        %1406 = vmatpush.msra.mxu0 %v1342
        %1407 = vmatpush.msra.mxu0 %v1341
        %1408 = vmatpush.msra.mxu0 %v1340
        %1409 = vmatpush.msra.mxu0 %v1339
        %1410 = vmatpush.msra.mxu0 %v1338
        %1411 = vmatpush.msra.mxu0 %v1337
        %1412 = vmatpush.msra.mxu0 %v1336
        %1413 = vmatmul.f32.gmra.mxu0 %v1273
        %v1414 = vpop.f32.mrf.mxu0
        %v1415 = vadd.f32 %v1386, %v1414
        %1416 = vmatmul.f32.gmra.mxu0 %v1274
        %v1417 = vpop.f32.mrf.mxu0
        %v1418 = vadd.f32 %v1389, %v1417
        %1419 = vmatmul.f32.gmra.mxu0 %v1275
        %v1420 = vpop.f32.mrf.mxu0
        %v1421 = vadd.f32 %v1392, %v1420
        %1422 = vmatmul.f32.gmra.mxu0 %v1276
        %v1423 = vpop.f32.mrf.mxu0
        %v1424 = vadd.f32 %v1395, %v1423
        %1425 = vdwg.mxu0
        %v1426 = vld [vmem:[%s5 + $0x100] sm:$0xff]
        %v1427 = vld [vmem:[%s5 + $0x108] sm:$0xff]
        %v1428 = vld [vmem:[%s5 + $0x110] sm:$0xff]
        %v1429 = vld [vmem:[%s5 + $0x118] sm:$0xff]
        %v1430 = vld [vmem:[%s5 + $0x120] sm:$0xff]
        %v1431 = vld [vmem:[%s5 + $0x128] sm:$0xff]
        %v1432 = vld [vmem:[%s5 + $0x130] sm:$0xff]
        %v1433 = vld [vmem:[%s5 + $0x138] sm:$0xff]
        %v1434 = vld [vmem:[%s5 + $0x140] sm:$0xff]
        %v1435 = vld [vmem:[%s5 + $0x148] sm:$0xff]
        %v1436 = vld [vmem:[%s5 + $0x150] sm:$0xff]
        %v1437 = vld [vmem:[%s5 + $0x158] sm:$0xff]
        %v1438 = vld [vmem:[%s5 + $0x160] sm:$0xff]
        %v1439 = vld [vmem:[%s5 + $0x168] sm:$0xff]
        %v1440 = vld [vmem:[%s5 + $0x170] sm:$0xff]
        %v1441 = vld [vmem:[%s5 + $0x178] sm:$0xff]
        %1442 = vmatpush.msra.mxu0 %v1441
        %1443 = vmatpush.msra.mxu0 %v1440
        %1444 = vmatpush.msra.mxu0 %v1439
        %1445 = vmatpush.msra.mxu0 %v1438
        %1446 = vmatpush.msra.mxu0 %v1437
        %1447 = vmatpush.msra.mxu0 %v1436
        %1448 = vmatpush.msra.mxu0 %v1435
        %1449 = vmatpush.msra.mxu0 %v1434
        %1450 = vmatpush.msra.mxu0 %v1433
        %1451 = vmatpush.msra.mxu0 %v1432
        %1452 = vmatpush.msra.mxu0 %v1431
        %1453 = vmatpush.msra.mxu0 %v1430
        %1454 = vmatpush.msra.mxu0 %v1429
        %1455 = vmatpush.msra.mxu0 %v1428
        %1456 = vmatpush.msra.mxu0 %v1427
        %1457 = vmatpush.msra.mxu0 %v1426
        %1458 = vmatmul.f32.gmra.mxu0 %v1325
        %v1459 = vpop.f32.mrf.mxu0
        %v1460 = vadd.f32 0.0, %v1459
        %1461 = vmatmul.f32.gmra.mxu0 %v1328
        %v1462 = vpop.f32.mrf.mxu0
        %v1463 = vadd.f32 0.0, %v1462
        %1464 = vmatmul.f32.gmra.mxu0 %v1331
        %v1465 = vpop.f32.mrf.mxu0
        %v1466 = vadd.f32 0.0, %v1465
        %1467 = vmatmul.f32.gmra.mxu0 %v1334
        %v1468 = vpop.f32.mrf.mxu0
        %v1469 = vadd.f32 0.0, %v1468
        %1470 = vdwg.mxu0
        %v1471 = vadd.f32 %v1415, %v1460
        %v1472 = vadd.f32 %v1418, %v1463
        %v1473 = vadd.f32 %v1421, %v1466
        %v1474 = vadd.f32 %v1424, %v1469
        %v1475 = vperm.slane %v1277, 0
        %v1476 = vadd.f32 %v1471, %v1475
        %v1477 = vadd.f32 %v1472, %v1475
        %v1478 = vadd.f32 %v1473, %v1475
        %v1479 = vadd.f32 %v1474, %v1475
        %v1480 = vmax.f32 %v1476, 0.0
        %v1481 = vmax.f32 %v1477, 0.0
        %v1482 = vmax.f32 %v1478, 0.0
        %v1483 = vmax.f32 %v1479, 0.0
        %v1484 = vadd.f32 %v1480, %v1481
        %v1485 = vadd.f32 %v1484, %v1482
        %v1486 = vadd.f32 %v1485, %v1483
        %v1487 = vrot.slane %v1486, 4
        %v1488 = vadd.f32 %v1486, %v1487
        %v1489 = vrot.slane %v1488, 2
        %v1490 = vadd.f32 %v1488, %v1489
        %v1491 = vrot.slane %v1490, 1
        %v1492 = vadd.f32 %v1490, %v1491
        %v1493 = vrcp.pop 32.0
        %v1494 = vmul.f32 32.0, %v1493
        %v1495 = vsub.f32 1.0, %v1494
        %v1496 = vmul.f32 %v1493, %v1495
        %v1497 = vadd.f32 %v1493, %v1496
        %vm1498 = vweird.f32 %v1493
        %v1499 = vsel %vm1498, %v1493, %v1497
        %v1500 = vmul.f32 %v1492, %v1499
        %v1501 = vmul.f32 %v1500, %v1500
        %1502 = vadd.xlane.f32.xlu0 %v1501
        %v1503 = vpop.xlane.xlu0 %1502
        %v1504 = vmax.f32 %v1503, 1e-24
        %v1505 = vrsqrt.pop %v1504
        %v1506 = vmul.f32 %v1505, %v1504
        %v1507 = vmul.f32 %v1506, %v1505
        %v1508 = vmul.f32 0.5, %v1507
        %v1509 = vsub.f32 1.5, %v1508
        %v1510 = vmul.f32 %v1505, %v1509
        %vm1511 = vweird.f32 %v1504
        %vm1512 = vweird.f32 %v1505
        %vm1513 = vmor %vm1511, %vm1512
        %v1514 = vsel %vm1513, %v1505, %v1510
        %v1515 = vmul.f32 %v1500, %v1514
        %v1516 = vld [vmem:[%s7] sm:$0x1]
        %v1517 = vmul.f32 %v1515, %v1516
        %v1518 = vld [vmem:[%s8] sm:$0x1]
        %v1519 = vadd.f32 %v1517, %v1518
        %vm1520 = vcmp.ge.f32.partialorder %v1519, 0.0
        %v1521 = vmul.f32 %v1519, 0.01
        %v1522 = vsel %vm1520, %v1519, %v1521
        %v1523 = vld [vmem:[%s9] sm:$0xff]
        %v1524 = vld [vmem:[%s9 + $0x8] sm:$0xff]
        %v1525 = vld [vmem:[%s9 + $0x10] sm:$0xff]
        %v1526 = vld [vmem:[%s9 + $0x18] sm:$0xff]
        %v1527 = vld [vmem:[%s9 + $0x20] sm:$0xff]
        %v1528 = vld [vmem:[%s9 + $0x28] sm:$0xff]
        %v1529 = vld [vmem:[%s9 + $0x30] sm:$0xff]
        %v1530 = vld [vmem:[%s9 + $0x38] sm:$0xff]
        %v1531 = vld [vmem:[%s9 + $0x40] sm:$0xff]
        %v1532 = vld [vmem:[%s9 + $0x48] sm:$0xff]
        %v1533 = vld [vmem:[%s9 + $0x50] sm:$0xff]
        %v1534 = vld [vmem:[%s9 + $0x58] sm:$0xff]
        %v1535 = vld [vmem:[%s9 + $0x60] sm:$0xff]
        %v1536 = vld [vmem:[%s9 + $0x68] sm:$0xff]
        %v1537 = vld [vmem:[%s9 + $0x70] sm:$0xff]
        %v1538 = vld [vmem:[%s9 + $0x78] sm:$0xff]
        %v1539 = vld [vmem:[%s10] sm:$0x1]
        %1540 = vmatpush.msra.mxu0 %v1538
        %1541 = vmatpush.msra.mxu0 %v1537
        %1542 = vmatpush.msra.mxu0 %v1536
        %1543 = vmatpush.msra.mxu0 %v1535
        %1544 = vmatpush.msra.mxu0 %v1534
        %1545 = vmatpush.msra.mxu0 %v1533
        %1546 = vmatpush.msra.mxu0 %v1532
        %1547 = vmatpush.msra.mxu0 %v1531
        %1548 = vmatpush.msra.mxu0 %v1530
        %1549 = vmatpush.msra.mxu0 %v1529
        %1550 = vmatpush.msra.mxu0 %v1528
        %1551 = vmatpush.msra.mxu0 %v1527
        %1552 = vmatpush.msra.mxu0 %v1526
        %1553 = vmatpush.msra.mxu0 %v1525
        %1554 = vmatpush.msra.mxu0 %v1524
        %1555 = vmatpush.msra.mxu0 %v1523
        %1556 = vmatmul.f32.gmra.mxu0 %v1522
        %v1557 = vpop.f32.mrf.mxu0
        %v1558 = vadd.f32 %v1539, %v1557
        %1559 = vdwg.mxu0
        %vm1560 = vcmask 16384
        %v1561 = vsel %vm1560, %v1558, -inf
        %1562 = vmax.xlane.f32.xlu0 %v1561
        %v1563 = vpop.xlane.xlu0 %1562
        %v1564 = vsub.f32 %v1558, %v1563
        %v1565 = vmul.f32 %v1564, 1.442695
        %v1566 = vpow.pop %v1565
        %v1567 = vsel %vm1560, %v1566, 0.0
        %1568 = vadd.xlane.f32.xlu0 %v1567
        %v1569 = vpop.xlane.xlu0 %1568
        %v1570 = vrcp.pop %v1569
        %v1571 = vmul.f32 %v1569, %v1570
        %v1572 = vsub.f32 1.0, %v1571
        %v1573 = vmul.f32 %v1570, %v1572
        %v1574 = vadd.f32 %v1570, %v1573
        %vm1575 = vweird.f32 %v1569
        %vm1576 = vweird.f32 %v1570
        %vm1577 = vmor %vm1575, %vm1576
        %v1578 = vsel %vm1577, %v1570, %v1574
        %v1579 = vand.u32 2147483647, %v1569
        %vm1580 = vcmp.eq.f32.partialorder %v1579, 8.507059e+37
        %v1581 = vand.u32 %v1569, 2147483648
        %v1582 = vor.u32 1.1754944e-38, %v1581
        %v1583 = vsel %vm1580, %v1582, %v1578
        %v1584 = vmul.f32 %v1566, %v1583
        %1585 = vst.msk [vmem:[%s378] sm:$0x1] %vm1560, %v1584
        %s1586 = sand.u32 %s269, 1
        %s1587 = scalar_lea.sflag [#allocation3], %s1586
        %s1588 = sand.u32 %s269, 1
        %s1589 = scalar_lea.vmem [#allocation2], %s1588
        // Predicated region
        $region65: #{time_conv_forward.1} parent=63 // pred_check
          %p1590 = pneg %p279
        $region66: #{time_conv_forward.1} parent=63 // pred_check_branch
          %1592 = sbr.rel (%p1590) target = $region68
        $region67: #{time_conv_forward.1} parent=63 // pred_region
          %1594 = vsyncadd %s1587, 0
          %s1595 = scalar_lea.hbm %s11, %s25
          %s1597 = sshll.u32 %s1589, 4
          %s1598 = int_to_ptr.vmem [resolvable:$true] %s1597
          %s1599 = sshll.u32 %s1595, 4
          %s1600 = int_to_ptr.hbm [resolvable:$true] %s1599
          %1602 = dma.vmem_to_hbm [thread:$0]  %s1598, 16, %s1600, %s1587
        $region68: #{time_conv_forward.1} parent=63 // pred_fallthru
          _
      $region64: #{time_conv_forward.1} parent=5 // pred_fallthru
        _
      %p1603 = scmp.le.s32.totalorder 2, %s20
      // Predicated region
      $region69: #{time_conv_forward.1} parent=5 // pred_check
        %p1604 = pneg %p1603
      $region70: #{time_conv_forward.1} parent=5 // pred_check_branch
        %1606 = sbr.rel (%p1604) target = $region72
      $region71: #{time_conv_forward.1} parent=5 // pred_region
        %s1607 = ssub.s32 %s20, 2
        // Predicated region
        $region73: #{time_conv_forward.1} parent=71 // pred_check
          %p1608 = pneg %p285
        $region74: #{time_conv_forward.1} parent=71 // pred_check_branch
          %1610 = sbr.rel (%p1608) target = $region76
        $region75: #{time_conv_forward.1} parent=71 // pred_region
          %s1611 = sand.u32 %s270, 1
          %s1612 = scalar_lea.sflag [#allocation3], %s1611
          %s1613 = sand.u32 %s270, 1
          %s1614 = scalar_lea.vmem [#allocation2], %s1613
          %1616 = dma.done %s1612, 16
        $region76: #{time_conv_forward.1} parent=71 // pred_fallthru
          _
      $region72: #{time_conv_forward.1} parent=5 // pred_fallthru
        _
    $region6: #{time_conv_forward.1} parent=1 // loop_footer
      %s24 = sadd.s32 1, %s20
    $region7: #{time_conv_forward.1} parent=1 // loop_footer_branch
      %19 = sbr.rel target = $region3
    $region8: #{time_conv_forward.1} parent=1 // loop_exit
      _
    %1617 = vsyncpa [#allocation3], 1
    %s1618 = scalar_lea.sflag [#allocation3], 1
    %1619 = vsyncpa %s1618, 1

</llo_original>
